<compile_context>
chip_gen: v7x
topology: tpu7x:2x2x1
jax: 0.10.0
libtpu: 0.0.40
codegen_flags: <defaults>
</compile_context>

<pallas_src>
import functools
import math

import jax
import jax.numpy as jnp
from jax.experimental import pallas as pl
from jax.experimental.pallas import tpu as pltpu


_PARAM_ORDER = ("ln1_w", "ln1_b", "w_qkv", "b_qkv", "w_out", "b_out",
                "ln2_w", "ln2_b", "w_fc", "b_fc", "w_proj", "b_proj")


# ---------------------------------------------------------------------------
# Fused whole-transformer kernel: grid = (layer, batch element).
# ---------------------------------------------------------------------------
def _transformer_kernel(x_ref, *refs, n_head, with_mask):
    if with_mask:
        mask_ref = refs[0]
        refs = refs[1:]
    (ln1w_ref, ln1b_ref, wqkv_ref, bqkv_ref, wo_ref, bo_ref,
     ln2w_ref, ln2b_ref, wfc_ref, bfc_ref, wpr_ref, bpr_ref,
     o_ref, xs_ref) = refs

    layer = pl.program_id(0)
    n = pl.program_id(1)

    # Layer 0: load this batch element's input into the persistent residual scratch.
    @pl.when(layer == 0)
    def _():
        xs_ref[n] = x_ref[0]

    x = xs_ref[n].astype(jnp.float32)                    # (L, D) fp32 working copy
    L, D = x.shape
    H = n_head
    Dh = D // H
    scale = 1.0 / math.sqrt(Dh)

    def layer_norm(v, w_ref, b_ref):
        # fp32 LayerNorm over last dim, eps=1e-5 (PyTorch default).
        mu = jnp.mean(v, axis=-1, keepdims=True)
        var = jnp.mean(jnp.square(v - mu), axis=-1, keepdims=True)
        return ((v - mu) * jax.lax.rsqrt(var + 1e-5)
                * w_ref[0].astype(jnp.float32) + b_ref[0].astype(jnp.float32))

    # ---- attention branch ---------------------------------------------------
    ln1 = layer_norm(x, ln1w_ref, ln1b_ref)
    qkv = (jnp.dot(ln1.astype(wqkv_ref.dtype), wqkv_ref[0],
                   preferred_element_type=jnp.float32)
           + bqkv_ref[0].astype(jnp.float32))            # (L, 3D)

    q2 = qkv[:, 0 * D:1 * D] * scale
    k2 = qkv[:, 1 * D:2 * D]
    v2 = qkv[:, 2 * D:3 * D]

    # Head-major (H, L, Dh) via lane-slices + major-axis stack (layout friendly),
    # then both attention matmuls as single batched einsums (bf16 in, fp32 acc).
    def to_heads(t):
        return jnp.stack([t[:, h * Dh:(h + 1) * Dh] for h in range(H)],
                         axis=0).astype(jnp.bfloat16)

    qh, kh, vh = to_heads(q2), to_heads(k2), to_heads(v2)

    s = jnp.einsum("hqd,hkd->hqk", qh, kh,
                   preferred_element_type=jnp.float32)   # (H, L, L)
    if with_mask:
        s = s + mask_ref[...]                            # additive mask, broadcast over heads
    s = s - jnp.max(s, axis=-1, keepdims=True)
    p = jnp.exp(s)
    p = p * pl.reciprocal(jnp.sum(p, axis=-1, keepdims=True), approx=True)

    ctx = jnp.einsum("hqk,hkd->hqd", p.astype(jnp.bfloat16), vh,
                     preferred_element_type=jnp.float32)  # (H, L, Dh)
    ctx2 = jnp.concatenate([ctx[h] for h in range(H)], axis=-1)   # (L, D)
    attn = (jnp.dot(ctx2.astype(wo_ref.dtype), wo_ref[0],
                    preferred_element_type=jnp.float32)
            + bo_ref[0].astype(jnp.float32))

    x = x + attn

    # ---- MLP branch -----------------------------------------------------------
    ln2 = layer_norm(x, ln2w_ref, ln2b_ref)
    h1 = (jnp.dot(ln2.astype(wfc_ref.dtype), wfc_ref[0],
                  preferred_element_type=jnp.float32)
          + bfc_ref[0].astype(jnp.float32))               # (L, 4D)
    g = h1 * jax.nn.sigmoid(1.702 * h1)                   # QuickGELU (fp32)
    mlp = (jnp.dot(g.astype(wpr_ref.dtype), wpr_ref[0],
                   preferred_element_type=jnp.float32)
           + bpr_ref[0].astype(jnp.float32))              # (L, D)

    x = x + mlp

    xs_ref[n] = x.astype(xs_ref.dtype)                    # carry residual to next layer
    o_ref[0] = x.astype(o_ref.dtype)                      # last layer's write is the result


# ---------------------------------------------------------------------------
# Wrapper
# ---------------------------------------------------------------------------
def transformer_forward(x_lnd, stacked_params, n_head, attn_mask=None):
    """x_lnd: (L, N, D) seq-major as in the PyTorch module. Returns (L, N, D)."""
    L, N, D = x_lnd.shape
    n_layers = stacked_params["w_qkv"].shape[0]

    # Pad seq length to a sublane multiple of 8; mask padded keys out of the softmax.
    L_pad = max(8, ((L + 7) // 8) * 8)
    mask = None if attn_mask is None else attn_mask.astype(jnp.float32)
    x = jnp.transpose(x_lnd, (1, 0, 2))                   # (N, L, D) batch-major
    if L_pad != L:
        x = jnp.pad(x, ((0, 0), (0, L_pad - L), (0, 0)))
        base = jnp.zeros((L, L), jnp.float32) if mask is None else mask
        m = jnp.full((L_pad, L_pad), -1e9, jnp.float32)   # mask out padded key columns
        m = m.at[:, :L].set(0.0)
        m = m.at[:L, :L].set(base)
        mask = m
    with_mask = mask is not None

    params = [stacked_params[k] for k in _PARAM_ORDER]
    param_specs = [pl.BlockSpec((1,) + p.shape[1:], lambda l, n: (l, 0, 0))
                   for p in params]

    in_specs = [pl.BlockSpec((1, L_pad, D), lambda l, n: (n, 0, 0))]
    inputs = [x]
    if with_mask:
        in_specs.append(pl.BlockSpec((L_pad, L_pad), lambda l, n: (0, 0)))
        inputs.append(mask)
    in_specs += param_specs
    inputs += params

    # Explicit VMEM budget: double-buffered per-layer weights + x/out blocks + residual scratch.
    per_layer_bytes = sum((p.size // n_layers) * p.dtype.itemsize for p in params)
    blk_bytes = L_pad * D * x.dtype.itemsize
    mask_bytes = L_pad * L_pad * 4 if with_mask else 0
    scratch_bytes = N * L_pad * D * x.dtype.itemsize
    needed = 2 * (per_layer_bytes + 2 * blk_bytes + mask_bytes) + scratch_bytes + (4 << 20)
    vmem_limit = int(min(64 << 20, max(needed, 32 << 20)))   # cap at v7x physical VMEM

    kernel = functools.partial(_transformer_kernel, n_head=n_head, with_mask=with_mask)
    out = pl.pallas_call(
        kernel,
        out_shape=jax.ShapeDtypeStruct((N, L_pad, D), x.dtype),
        grid_spec=pltpu.PrefetchScalarGridSpec(
            num_scalar_prefetch=0,
            grid=(n_layers, N),                            # layer outer (sequential), batch inner
            in_specs=in_specs,
            out_specs=pl.BlockSpec((1, L_pad, D), lambda l, n: (n, 0, 0)),
            scratch_shapes=[pltpu.VMEM((N, L_pad, D), x.dtype)],  # residual stream across layers
        ),
        compiler_params=pltpu.CompilerParams(
            dimension_semantics=("arbitrary", "parallel"),
            vmem_limit_bytes=vmem_limit,
        ),
    )(*inputs)

    if L_pad != L:
        out = out[:, :L, :]
    return jnp.transpose(out, (1, 0, 2))                  # back to (L, N, D)
    # TODO(synk): maple_prompts dynamic-context insertion is host-side slice/concat glue between
    # block calls; not implemented since the default forward has maple_prompts=None.


# ---------------------------------------------------------------------------
# Parameter init (deterministic synthetic weights, PyTorch shapes pre-transposed so the kernel
# computes x @ W; linear weights stored in bf16, LN params / biases in fp32).
# ---------------------------------------------------------------------------
def init_block_params(key, d_model, weight_dtype=jnp.bfloat16):
    ks = jax.random.split(key, 4)
    std = 0.02
    t = lambda w: jnp.transpose(w).astype(weight_dtype)   # (out,in) -> (in,out)
    return {
        "ln1_w": jnp.ones((1, d_model), jnp.float32),
        "ln1_b": jnp.zeros((1, d_model), jnp.float32),
        "w_qkv": t(std * jax.random.normal(ks[0], (3 * d_model, d_model), jnp.float32)),
        "b_qkv": jnp.zeros((1, 3 * d_model), jnp.float32),
        "w_out": t(std * jax.random.normal(ks[1], (d_model, d_model), jnp.float32)),
        "b_out": jnp.zeros((1, d_model), jnp.float32),
        "ln2_w": jnp.ones((1, d_model), jnp.float32),
        "ln2_b": jnp.zeros((1, d_model), jnp.float32),
        "w_fc": t(std * jax.random.normal(ks[2], (4 * d_model, d_model), jnp.float32)),
        "b_fc": jnp.zeros((1, 4 * d_model), jnp.float32),
        "w_proj": t(std * jax.random.normal(ks[3], (d_model, 4 * d_model), jnp.float32)),
        "b_proj": jnp.zeros((1, d_model), jnp.float32),
    }


def stack_block_params(per_layer_params):
    return {k: jnp.stack([p[k] for p in per_layer_params], axis=0)
            for k in per_layer_params[0]}


# ---------------------------------------------------------------------------
# Pure-JAX reference (fp32) for a correctness check.
# ---------------------------------------------------------------------------
def _reference_forward(x_lnd, per_layer_params, n_head, attn_mask=None):
    x = x_lnd.astype(jnp.float32)
    L, N, D = x.shape
    H, Dh = n_head, x.shape[-1] // n_head

    def ln(v, w, b):
        mu = v.mean(-1, keepdims=True)
        var = jnp.square(v - mu).mean(-1, keepdims=True)
        return (v - mu) * jax.lax.rsqrt(var + 1e-5) * w[0] + b[0]

    for p in per_layer_params:
        h = ln(x, p["ln1_w"], p["ln1_b"])
        qkv = h @ p["w_qkv"].astype(jnp.float32) + p["b_qkv"][0]
        q, k, v = qkv[..., :D], qkv[..., D:2 * D], qkv[..., 2 * D:]
        split = lambda t: jnp.transpose(t.reshape(L, N, H, Dh), (1, 2, 0, 3))
        qh, kh, vh = split(q) / math.sqrt(Dh), split(k), split(v)
        s = jnp.einsum("nhqd,nhkd->nhqk", qh, kh)
        if attn_mask is not None:
            s = s + attn_mask
        pr = jax.nn.softmax(s, axis=-1)
        ctx = jnp.einsum("nhqk,nhkd->nhqd", pr, vh)
        ctx = jnp.transpose(ctx, (2, 0, 1, 3)).reshape(L, N, D)
        x = x + ctx @ p["w_out"].astype(jnp.float32) + p["b_out"][0]
        h2 = ln(x, p["ln2_w"], p["ln2_b"])
        fc = h2 @ p["w_fc"].astype(jnp.float32) + p["b_fc"][0]
        g = fc * jax.nn.sigmoid(1.702 * fc)
        x = x + g @ p["w_proj"].astype(jnp.float32) + p["b_proj"][0]
    return x


if __name__ == "__main__":
    # Small shapes: width=32, heads=4, layers=2, seq=8, batch=2
    width, heads, layers = 32, 4, 2
    seq, batch = 8, 2

    key = jax.random.PRNGKey(0)
    key, xk = jax.random.split(key)
    x = jax.random.normal(xk, (seq, batch, width), jnp.float32)   # (L, N, D)

    block_keys = jax.random.split(key, layers)
    per_layer = [init_block_params(block_keys[i], width) for i in range(layers)]
    stacked = stack_block_params(per_layer)

    out = transformer_forward(x, stacked, n_head=heads, attn_mask=None)
    out = jax.block_until_ready(out)

    assert out.shape == (seq, batch, width), out.shape
    assert bool(jnp.all(jnp.isfinite(out)))

    ref = _reference_forward(x, per_layer, heads, attn_mask=None)
    max_err = float(jnp.max(jnp.abs(out.astype(jnp.float32) - ref)))
    assert max_err < 5e-2, f"max abs error vs reference: {max_err}"

    print("KERNEL_OK")
</pallas_src>

<mosaic_0001>
module attributes {stable_mosaic.version = 11 : i64} {
  func.func @_transformer_kernel(%arg0: i32, %arg1: i32, %arg2: memref<1x8x32xf32, #tpu.memory_space<vmem>>, %arg3: memref<1x1x32xf32, #tpu.memory_space<vmem>>, %arg4: memref<1x1x32xf32, #tpu.memory_space<vmem>>, %arg5: memref<1x32x96xbf16, #tpu.memory_space<vmem>>, %arg6: memref<1x1x96xf32, #tpu.memory_space<vmem>>, %arg7: memref<1x32x32xbf16, #tpu.memory_space<vmem>>, %arg8: memref<1x1x32xf32, #tpu.memory_space<vmem>>, %arg9: memref<1x1x32xf32, #tpu.memory_space<vmem>>, %arg10: memref<1x1x32xf32, #tpu.memory_space<vmem>>, %arg11: memref<1x32x128xbf16, #tpu.memory_space<vmem>>, %arg12: memref<1x1x128xf32, #tpu.memory_space<vmem>>, %arg13: memref<1x128x32xbf16, #tpu.memory_space<vmem>>, %arg14: memref<1x1x32xf32, #tpu.memory_space<vmem>>, %arg15: memref<1x8x32xf32, #tpu.memory_space<vmem>>, %arg16: memref<2x8x32xf32, #tpu.memory_space<vmem>>) attributes {dimension_semantics = [#tpu.dimension_semantics<arbitrary>, #tpu.dimension_semantics<parallel>], iteration_bounds = array<i64: 2, 2>, scalar_prefetch = 0 : i64, scratch_operands = 1 : i64, tpu.core_type = #tpu.core_type<tc>, window_params = [{transform_indices = @transform_0, window_bounds = array<i64: 1, 8, 32>}, {transform_indices = @transform_1, window_bounds = array<i64: 1, 1, 32>}, {transform_indices = @transform_2, window_bounds = array<i64: 1, 1, 32>}, {transform_indices = @transform_3, window_bounds = array<i64: 1, 32, 96>}, {transform_indices = @transform_4, window_bounds = array<i64: 1, 1, 96>}, {transform_indices = @transform_5, window_bounds = array<i64: 1, 32, 32>}, {transform_indices = @transform_6, window_bounds = array<i64: 1, 1, 32>}, {transform_indices = @transform_7, window_bounds = array<i64: 1, 1, 32>}, {transform_indices = @transform_8, window_bounds = array<i64: 1, 1, 32>}, {transform_indices = @transform_9, window_bounds = array<i64: 1, 32, 128>}, {transform_indices = @transform_10, window_bounds = array<i64: 1, 1, 128>}, {transform_indices = @transform_11, window_bounds = array<i64: 1, 128, 32>}, {transform_indices = @transform_12, window_bounds = array<i64: 1, 1, 32>}, {transform_indices = @transform_13, window_bounds = array<i64: 1, 8, 32>}]} {
    %c0_i32 = arith.constant 0 : i32
    %0 = arith.cmpi eq, %arg0, %c0_i32 : i32
    %1 = arith.extui %0 : i1 to i32
    %c0_i32_0 = arith.constant 0 : i32
    %2 = arith.cmpi ne, %1, %c0_i32_0 : i32
    scf.if %2 {
      %c0_63 = arith.constant 0 : index
      %c0_64 = arith.constant 0 : index
      %c0_65 = arith.constant 0 : index
      %164 = vector.load %arg2[%c0_63, %c0_64, %c0_65] : memref<1x8x32xf32, #tpu.memory_space<vmem>>, vector<1x8x32xf32>
      %165 = vector.shape_cast %164 : vector<1x8x32xf32> to vector<8x32xf32>
      %166 = arith.index_cast %arg1 : i32 to index
      %c0_66 = arith.constant 0 : index
      %c0_67 = arith.constant 0 : index
      %167 = vector.load %arg16[%166, %c0_66, %c0_67] : memref<2x8x32xf32, #tpu.memory_space<vmem>>, vector<1x8x32xf32>
      %168 = vector.shape_cast %167 : vector<1x8x32xf32> to vector<8x32xf32>
      %169 = vector.shape_cast %165 : vector<8x32xf32> to vector<1x8x32xf32>
      tpu.vector_store %arg16[%166, %c0_66, %c0_67], %169 {strides = array<i32>} : memref<2x8x32xf32, #tpu.memory_space<vmem>>, vector<1x8x32xf32>,
    } else {
    }
    %3 = arith.index_cast %arg1 : i32 to index
    %c0 = arith.constant 0 : index
    %c0_1 = arith.constant 0 : index
    %4 = vector.load %arg16[%3, %c0, %c0_1] : memref<2x8x32xf32, #tpu.memory_space<vmem>>, vector<1x8x32xf32>
    %5 = vector.shape_cast %4 : vector<1x8x32xf32> to vector<8x32xf32>
    %cst = arith.constant dense<0.000000e+00> : vector<8xf32>
    %6 = vector.multi_reduction <add>, %5, %cst [1] : vector<8x32xf32> to vector<8xf32>
    %7 = vector.shape_cast %6 : vector<8xf32> to vector<8x1xf32>
    %cst_2 = arith.constant 3.200000e+01 : f32
    %8 = vector.broadcast %cst_2 : f32 to vector<8x1xf32>
    %9 = arith.divf %7, %8 : vector<8x1xf32>
    %10 = vector.broadcast %9 : vector<8x1xf32> to vector<8x32xf32>
    %11 = arith.subf %5, %10 : vector<8x32xf32>
    %12 = arith.mulf %11, %11 : vector<8x32xf32>
    %cst_3 = arith.constant dense<0.000000e+00> : vector<8xf32>
    %13 = vector.multi_reduction <add>, %12, %cst_3 [1] : vector<8x32xf32> to vector<8xf32>
    %14 = vector.shape_cast %13 : vector<8xf32> to vector<8x1xf32>
    %cst_4 = arith.constant 3.200000e+01 : f32
    %15 = vector.broadcast %cst_4 : f32 to vector<8x1xf32>
    %16 = arith.divf %14, %15 : vector<8x1xf32>
    %17 = vector.broadcast %9 : vector<8x1xf32> to vector<8x32xf32>
    %18 = arith.subf %5, %17 : vector<8x32xf32>
    %cst_5 = arith.constant 9.99999974E-6 : f32
    %19 = vector.broadcast %cst_5 : f32 to vector<8x1xf32>
    %20 = arith.addf %16, %19 : vector<8x1xf32>
    %21 = math.rsqrt %20 : vector<8x1xf32>
    %22 = vector.broadcast %21 : vector<8x1xf32> to vector<8x32xf32>
    %23 = arith.mulf %18, %22 : vector<8x32xf32>
    %c0_6 = arith.constant 0 : index
    %c0_7 = arith.constant 0 : index
    %c0_8 = arith.constant 0 : index
    %24 = vector.load %arg3[%c0_6, %c0_7, %c0_8] : memref<1x1x32xf32, #tpu.memory_space<vmem>>, vector<1x1x32xf32>
    %25 = vector.shape_cast %24 : vector<1x1x32xf32> to vector<1x32xf32>
    %26 = vector.broadcast %25 : vector<1x32xf32> to vector<8x32xf32>
    %27 = arith.mulf %23, %26 : vector<8x32xf32>
    %c0_9 = arith.constant 0 : index
    %c0_10 = arith.constant 0 : index
    %c0_11 = arith.constant 0 : index
    %28 = vector.load %arg4[%c0_9, %c0_10, %c0_11] : memref<1x1x32xf32, #tpu.memory_space<vmem>>, vector<1x1x32xf32>
    %29 = vector.shape_cast %28 : vector<1x1x32xf32> to vector<1x32xf32>
    %30 = vector.broadcast %29 : vector<1x32xf32> to vector<8x32xf32>
    %31 = arith.addf %27, %30 : vector<8x32xf32>
    %32 = arith.truncf %31 : vector<8x32xf32> to vector<8x32xbf16>
    %c0_12 = arith.constant 0 : index
    %c0_13 = arith.constant 0 : index
    %c0_14 = arith.constant 0 : index
    %33 = vector.load %arg5[%c0_12, %c0_13, %c0_14] : memref<1x32x96xbf16, #tpu.memory_space<vmem>>, vector<1x32x96xbf16>
    %34 = vector.shape_cast %33 : vector<1x32x96xbf16> to vector<32x96xbf16>
    %cst_15 = arith.constant dense<0.000000e+00> : vector<8x96xf32>
    %35 = tpu.matmul %32, %34, %cst_15 {dimension_numbers = #tpu.dot_dimension_numbers<[1], [0], [0], [1], [0, 0, 1, 1], [], []>} : vector<8x32xbf16>, vector<32x96xbf16>, vector<8x96xf32> -> vector<8x96xf32>
    %c0_16 = arith.constant 0 : index
    %c0_17 = arith.constant 0 : index
    %c0_18 = arith.constant 0 : index
    %36 = vector.load %arg6[%c0_16, %c0_17, %c0_18] : memref<1x1x96xf32, #tpu.memory_space<vmem>>, vector<1x1x96xf32>
    %37 = vector.shape_cast %36 : vector<1x1x96xf32> to vector<1x96xf32>
    %38 = vector.broadcast %37 : vector<1x96xf32> to vector<8x96xf32>
    %39 = arith.addf %35, %38 : vector<8x96xf32>
    %40 = vector.extract_strided_slice %39 {offsets = [0, 0], sizes = [8, 32], strides = [1, 1]} : vector<8x96xf32> to vector<8x32xf32>
    %cst_19 = arith.constant 0.353553385 : f32
    %41 = vector.broadcast %cst_19 : f32 to vector<8x32xf32>
    %42 = arith.mulf %40, %41 : vector<8x32xf32>
    %43 = vector.extract_strided_slice %39 {offsets = [0, 32], sizes = [8, 32], strides = [1, 1]} : vector<8x96xf32> to vector<8x32xf32>
    %44 = vector.extract_strided_slice %39 {offsets = [0, 64], sizes = [8, 32], strides = [1, 1]} : vector<8x96xf32> to vector<8x32xf32>
    %45 = vector.extract_strided_slice %42 {offsets = [0, 0], sizes = [8, 8], strides = [1, 1]} : vector<8x32xf32> to vector<8x8xf32>
    %46 = vector.extract_strided_slice %42 {offsets = [0, 8], sizes = [8, 8], strides = [1, 1]} : vector<8x32xf32> to vector<8x8xf32>
    %47 = vector.extract_strided_slice %42 {offsets = [0, 16], sizes = [8, 8], strides = [1, 1]} : vector<8x32xf32> to vector<8x8xf32>
    %48 = vector.extract_strided_slice %42 {offsets = [0, 24], sizes = [8, 8], strides = [1, 1]} : vector<8x32xf32> to vector<8x8xf32>
    %49 = vector.shape_cast %45 : vector<8x8xf32> to vector<1x8x8xf32>
    %50 = vector.shape_cast %46 : vector<8x8xf32> to vector<1x8x8xf32>
    %51 = vector.shape_cast %47 : vector<8x8xf32> to vector<1x8x8xf32>
    %52 = vector.shape_cast %48 : vector<8x8xf32> to vector<1x8x8xf32>
    %53 = tpu.concatenate %49, %50, %51, %52 in 0 : vector<1x8x8xf32>, vector<1x8x8xf32>, vector<1x8x8xf32>, vector<1x8x8xf32> -> vector<4x8x8xf32>
    %54 = arith.truncf %53 : vector<4x8x8xf32> to vector<4x8x8xbf16>
    %55 = vector.extract_strided_slice %43 {offsets = [0, 0], sizes = [8, 8], strides = [1, 1]} : vector<8x32xf32> to vector<8x8xf32>
    %56 = vector.extract_strided_slice %43 {offsets = [0, 8], sizes = [8, 8], strides = [1, 1]} : vector<8x32xf32> to vector<8x8xf32>
    %57 = vector.extract_strided_slice %43 {offsets = [0, 16], sizes = [8, 8], strides = [1, 1]} : vector<8x32xf32> to vector<8x8xf32>
    %58 = vector.extract_strided_slice %43 {offsets = [0, 24], sizes = [8, 8], strides = [1, 1]} : vector<8x32xf32> to vector<8x8xf32>
    %59 = vector.shape_cast %55 : vector<8x8xf32> to vector<1x8x8xf32>
    %60 = vector.shape_cast %56 : vector<8x8xf32> to vector<1x8x8xf32>
    %61 = vector.shape_cast %57 : vector<8x8xf32> to vector<1x8x8xf32>
    %62 = vector.shape_cast %58 : vector<8x8xf32> to vector<1x8x8xf32>
    %63 = tpu.concatenate %59, %60, %61, %62 in 0 : vector<1x8x8xf32>, vector<1x8x8xf32>, vector<1x8x8xf32>, vector<1x8x8xf32> -> vector<4x8x8xf32>
    %64 = arith.truncf %63 : vector<4x8x8xf32> to vector<4x8x8xbf16>
    %65 = vector.extract_strided_slice %44 {offsets = [0, 0], sizes = [8, 8], strides = [1, 1]} : vector<8x32xf32> to vector<8x8xf32>
    %66 = vector.extract_strided_slice %44 {offsets = [0, 8], sizes = [8, 8], strides = [1, 1]} : vector<8x32xf32> to vector<8x8xf32>
    %67 = vector.extract_strided_slice %44 {offsets = [0, 16], sizes = [8, 8], strides = [1, 1]} : vector<8x32xf32> to vector<8x8xf32>
    %68 = vector.extract_strided_slice %44 {offsets = [0, 24], sizes = [8, 8], strides = [1, 1]} : vector<8x32xf32> to vector<8x8xf32>
    %69 = vector.shape_cast %65 : vector<8x8xf32> to vector<1x8x8xf32>
    %70 = vector.shape_cast %66 : vector<8x8xf32> to vector<1x8x8xf32>
    %71 = vector.shape_cast %67 : vector<8x8xf32> to vector<1x8x8xf32>
    %72 = vector.shape_cast %68 : vector<8x8xf32> to vector<1x8x8xf32>
    %73 = tpu.concatenate %69, %70, %71, %72 in 0 : vector<1x8x8xf32>, vector<1x8x8xf32>, vector<1x8x8xf32>, vector<1x8x8xf32> -> vector<4x8x8xf32>
    %74 = arith.truncf %73 : vector<4x8x8xf32> to vector<4x8x8xbf16>
    "tpu.trace_start"() <{level = 10 : i32, message = "hqd,hkd->hqk"}> : () -> ()
    %cst_20 = arith.constant dense<0.000000e+00> : vector<4x8x8xf32>
    %75 = tpu.matmul %54, %64, %cst_20 {dimension_numbers = #tpu.dot_dimension_numbers<[2], [2], [1], [1], [0, 0, 0, 1, 1, 1], [0], [0]>} : vector<4x8x8xbf16>, vector<4x8x8xbf16>, vector<4x8x8xf32> -> vector<4x8x8xf32>
    "tpu.trace_stop"() : () -> ()
    %cst_21 = arith.constant dense<0xFF800000> : vector<4x8xf32>
    %76 = vector.multi_reduction <maximumf>, %75, %cst_21 [2] : vector<4x8x8xf32> to vector<4x8xf32>
    %77 = vector.shape_cast %76 : vector<4x8xf32> to vector<4x8x1xf32>
    %78 = vector.broadcast %77 : vector<4x8x1xf32> to vector<4x8x8xf32>
    %79 = arith.subf %75, %78 : vector<4x8x8xf32>
    %80 = math.exp %79 : vector<4x8x8xf32>
    %cst_22 = arith.constant dense<0.000000e+00> : vector<4x8xf32>
    %81 = vector.multi_reduction <add>, %80, %cst_22 [2] : vector<4x8x8xf32> to vector<4x8xf32>
    %82 = vector.shape_cast %81 : vector<4x8xf32> to vector<4x8x1xf32>
    %83 = tpu.reciprocal %82 {approx = true} : vector<4x8x1xf32> -> vector<4x8x1xf32>
    %84 = vector.broadcast %83 : vector<4x8x1xf32> to vector<4x8x8xf32>
    %85 = arith.mulf %80, %84 : vector<4x8x8xf32>
    %86 = arith.truncf %85 : vector<4x8x8xf32> to vector<4x8x8xbf16>
    "tpu.trace_start"() <{level = 10 : i32, message = "hqk,hkd->hqd"}> : () -> ()
    %cst_23 = arith.constant dense<0.000000e+00> : vector<4x8x8xf32>
    %87 = tpu.matmul %86, %74, %cst_23 {dimension_numbers = #tpu.dot_dimension_numbers<[2], [1], [1], [2], [0, 0, 0, 1, 1, 2], [0], [0]>} : vector<4x8x8xbf16>, vector<4x8x8xbf16>, vector<4x8x8xf32> -> vector<4x8x8xf32>
    "tpu.trace_stop"() : () -> ()
    %88 = vector.extract_strided_slice %87 {offsets = [0, 0, 0], sizes = [1, 8, 8], strides = [1, 1, 1]} : vector<4x8x8xf32> to vector<1x8x8xf32>
    %89 = vector.shape_cast %88 : vector<1x8x8xf32> to vector<8x8xf32>
    %90 = vector.extract_strided_slice %87 {offsets = [1, 0, 0], sizes = [1, 8, 8], strides = [1, 1, 1]} : vector<4x8x8xf32> to vector<1x8x8xf32>
    %91 = vector.shape_cast %90 : vector<1x8x8xf32> to vector<8x8xf32>
    %92 = vector.extract_strided_slice %87 {offsets = [2, 0, 0], sizes = [1, 8, 8], strides = [1, 1, 1]} : vector<4x8x8xf32> to vector<1x8x8xf32>
    %93 = vector.shape_cast %92 : vector<1x8x8xf32> to vector<8x8xf32>
    %94 = vector.extract_strided_slice %87 {offsets = [3, 0, 0], sizes = [1, 8, 8], strides = [1, 1, 1]} : vector<4x8x8xf32> to vector<1x8x8xf32>
    %95 = vector.shape_cast %94 : vector<1x8x8xf32> to vector<8x8xf32>
    %96 = tpu.concatenate %89, %91, %93, %95 in 1 : vector<8x8xf32>, vector<8x8xf32>, vector<8x8xf32>, vector<8x8xf32> -> vector<8x32xf32>
    %97 = arith.truncf %96 : vector<8x32xf32> to vector<8x32xbf16>
    %c0_24 = arith.constant 0 : index
    %c0_25 = arith.constant 0 : index
    %c0_26 = arith.constant 0 : index
    %98 = vector.load %arg7[%c0_24, %c0_25, %c0_26] : memref<1x32x32xbf16, #tpu.memory_space<vmem>>, vector<1x32x32xbf16>
    %99 = vector.shape_cast %98 : vector<1x32x32xbf16> to vector<32x32xbf16>
    %cst_27 = arith.constant dense<0.000000e+00> : vector<8x32xf32>
    %100 = tpu.matmul %97, %99, %cst_27 {dimension_numbers = #tpu.dot_dimension_numbers<[1], [0], [0], [1], [0, 0, 1, 1], [], []>} : vector<8x32xbf16>, vector<32x32xbf16>, vector<8x32xf32> -> vector<8x32xf32>
    %c0_28 = arith.constant 0 : index
    %c0_29 = arith.constant 0 : index
    %c0_30 = arith.constant 0 : index
    %101 = vector.load %arg8[%c0_28, %c0_29, %c0_30] : memref<1x1x32xf32, #tpu.memory_space<vmem>>, vector<1x1x32xf32>
    %102 = vector.shape_cast %101 : vector<1x1x32xf32> to vector<1x32xf32>
    %103 = vector.broadcast %102 : vector<1x32xf32> to vector<8x32xf32>
    %104 = arith.addf %100, %103 : vector<8x32xf32>
    %105 = arith.addf %5, %104 : vector<8x32xf32>
    %cst_31 = arith.constant dense<0.000000e+00> : vector<8xf32>
    %106 = vector.multi_reduction <add>, %105, %cst_31 [1] : vector<8x32xf32> to vector<8xf32>
    %107 = vector.shape_cast %106 : vector<8xf32> to vector<8x1xf32>
    %cst_32 = arith.constant 3.200000e+01 : f32
    %108 = vector.broadcast %cst_32 : f32 to vector<8x1xf32>
    %109 = arith.divf %107, %108 : vector<8x1xf32>
    %110 = vector.broadcast %109 : vector<8x1xf32> to vector<8x32xf32>
    %111 = arith.subf %105, %110 : vector<8x32xf32>
    %112 = arith.mulf %111, %111 : vector<8x32xf32>
    %cst_33 = arith.constant dense<0.000000e+00> : vector<8xf32>
    %113 = vector.multi_reduction <add>, %112, %cst_33 [1] : vector<8x32xf32> to vector<8xf32>
    %114 = vector.shape_cast %113 : vector<8xf32> to vector<8x1xf32>
    %cst_34 = arith.constant 3.200000e+01 : f32
    %115 = vector.broadcast %cst_34 : f32 to vector<8x1xf32>
    %116 = arith.divf %114, %115 : vector<8x1xf32>
    %117 = vector.broadcast %109 : vector<8x1xf32> to vector<8x32xf32>
    %118 = arith.subf %105, %117 : vector<8x32xf32>
    %cst_35 = arith.constant 9.99999974E-6 : f32
    %119 = vector.broadcast %cst_35 : f32 to vector<8x1xf32>
    %120 = arith.addf %116, %119 : vector<8x1xf32>
    %121 = math.rsqrt %120 : vector<8x1xf32>
    %122 = vector.broadcast %121 : vector<8x1xf32> to vector<8x32xf32>
    %123 = arith.mulf %118, %122 : vector<8x32xf32>
    %c0_36 = arith.constant 0 : index
    %c0_37 = arith.constant 0 : index
    %c0_38 = arith.constant 0 : index
    %124 = vector.load %arg9[%c0_36, %c0_37, %c0_38] : memref<1x1x32xf32, #tpu.memory_space<vmem>>, vector<1x1x32xf32>
    %125 = vector.shape_cast %124 : vector<1x1x32xf32> to vector<1x32xf32>
    %126 = vector.broadcast %125 : vector<1x32xf32> to vector<8x32xf32>
    %127 = arith.mulf %123, %126 : vector<8x32xf32>
    %c0_39 = arith.constant 0 : index
    %c0_40 = arith.constant 0 : index
    %c0_41 = arith.constant 0 : index
    %128 = vector.load %arg10[%c0_39, %c0_40, %c0_41] : memref<1x1x32xf32, #tpu.memory_space<vmem>>, vector<1x1x32xf32>
    %129 = vector.shape_cast %128 : vector<1x1x32xf32> to vector<1x32xf32>
    %130 = vector.broadcast %129 : vector<1x32xf32> to vector<8x32xf32>
    %131 = arith.addf %127, %130 : vector<8x32xf32>
    %132 = arith.truncf %131 : vector<8x32xf32> to vector<8x32xbf16>
    %c0_42 = arith.constant 0 : index
    %c0_43 = arith.constant 0 : index
    %c0_44 = arith.constant 0 : index
    %133 = vector.load %arg11[%c0_42, %c0_43, %c0_44] : memref<1x32x128xbf16, #tpu.memory_space<vmem>>, vector<1x32x128xbf16>
    %134 = vector.shape_cast %133 : vector<1x32x128xbf16> to vector<32x128xbf16>
    %cst_45 = arith.constant dense<0.000000e+00> : vector<8x128xf32>
    %135 = tpu.matmul %132, %134, %cst_45 {dimension_numbers = #tpu.dot_dimension_numbers<[1], [0], [0], [1], [0, 0, 1, 1], [], []>} : vector<8x32xbf16>, vector<32x128xbf16>, vector<8x128xf32> -> vector<8x128xf32>
    %c0_46 = arith.constant 0 : index
    %c0_47 = arith.constant 0 : index
    %c0_48 = arith.constant 0 : index
    %136 = vector.load %arg12[%c0_46, %c0_47, %c0_48] : memref<1x1x128xf32, #tpu.memory_space<vmem>>, vector<1x1x128xf32>
    %137 = vector.shape_cast %136 : vector<1x1x128xf32> to vector<1x128xf32>
    %138 = vector.broadcast %137 : vector<1x128xf32> to vector<8x128xf32>
    %139 = arith.addf %135, %138 : vector<8x128xf32>
    %cst_49 = arith.constant 1.702000e+00 : f32
    %140 = vector.broadcast %cst_49 : f32 to vector<8x128xf32>
    %141 = arith.mulf %140, %139 : vector<8x128xf32>
    %142 = arith.negf %141 : vector<8x128xf32>
    %143 = math.exp %142 : vector<8x128xf32>
    %cst_50 = arith.constant 1.000000e+00 : f32
    %144 = vector.broadcast %cst_50 : f32 to vector<8x128xf32>
    %145 = arith.addf %144, %143 : vector<8x128xf32>
    %146 = arith.divf %144, %145 : vector<8x128xf32>
    %147 = arith.mulf %139, %146 : vector<8x128xf32>
    %148 = arith.truncf %147 : vector<8x128xf32> to vector<8x128xbf16>
    %c0_51 = arith.constant 0 : index
    %c0_52 = arith.constant 0 : index
    %c0_53 = arith.constant 0 : index
    %149 = vector.load %arg13[%c0_51, %c0_52, %c0_53] : memref<1x128x32xbf16, #tpu.memory_space<vmem>>, vector<1x128x32xbf16>
    %150 = vector.shape_cast %149 : vector<1x128x32xbf16> to vector<128x32xbf16>
    %cst_54 = arith.constant dense<0.000000e+00> : vector<8x32xf32>
    %151 = tpu.matmul %148, %150, %cst_54 {dimension_numbers = #tpu.dot_dimension_numbers<[1], [0], [0], [1], [0, 0, 1, 1], [], []>} : vector<8x128xbf16>, vector<128x32xbf16>, vector<8x32xf32> -> vector<8x32xf32>
    %c0_55 = arith.constant 0 : index
    %c0_56 = arith.constant 0 : index
    %c0_57 = arith.constant 0 : index
    %152 = vector.load %arg14[%c0_55, %c0_56, %c0_57] : memref<1x1x32xf32, #tpu.memory_space<vmem>>, vector<1x1x32xf32>
    %153 = vector.shape_cast %152 : vector<1x1x32xf32> to vector<1x32xf32>
    %154 = vector.broadcast %153 : vector<1x32xf32> to vector<8x32xf32>
    %155 = arith.addf %151, %154 : vector<8x32xf32>
    %156 = arith.addf %105, %155 : vector<8x32xf32>
    %157 = arith.index_cast %arg1 : i32 to index
    %c0_58 = arith.constant 0 : index
    %c0_59 = arith.constant 0 : index
    %158 = vector.load %arg16[%157, %c0_58, %c0_59] : memref<2x8x32xf32, #tpu.memory_space<vmem>>, vector<1x8x32xf32>
    %159 = vector.shape_cast %158 : vector<1x8x32xf32> to vector<8x32xf32>
    %160 = vector.shape_cast %156 : vector<8x32xf32> to vector<1x8x32xf32>
    tpu.vector_store %arg16[%157, %c0_58, %c0_59], %160 {strides = array<i32>} : memref<2x8x32xf32, #tpu.memory_space<vmem>>, vector<1x8x32xf32>,
    %c0_60 = arith.constant 0 : index
    %c0_61 = arith.constant 0 : index
    %c0_62 = arith.constant 0 : index
    %161 = vector.load %arg15[%c0_60, %c0_61, %c0_62] : memref<1x8x32xf32, #tpu.memory_space<vmem>>, vector<1x8x32xf32>
    %162 = vector.shape_cast %161 : vector<1x8x32xf32> to vector<8x32xf32>
    %163 = vector.shape_cast %156 : vector<8x32xf32> to vector<1x8x32xf32>
    tpu.vector_store %arg15[%c0_60, %c0_61, %c0_62], %163 {strides = array<i32>} : memref<1x8x32xf32, #tpu.memory_space<vmem>>, vector<1x8x32xf32>,
    return
  }
  func.func @transform_0(%arg0: i32, %arg1: i32) -> (i32, i32, i32) {
    %c0_i32 = arith.constant 0 : i32
    %c0_i32_0 = arith.constant 0 : i32
    %c0_i32_1 = arith.constant 0 : i32
    return %arg1, %c0_i32, %c0_i32_0 : i32, i32, i32
  }
  func.func @transform_1(%arg0: i32, %arg1: i32) -> (i32, i32, i32) {
    %c0_i32 = arith.constant 0 : i32
    %c0_i32_0 = arith.constant 0 : i32
    %c0_i32_1 = arith.constant 0 : i32
    return %arg0, %c0_i32, %c0_i32_0 : i32, i32, i32
  }
  func.func @transform_2(%arg0: i32, %arg1: i32) -> (i32, i32, i32) {
    %c0_i32 = arith.constant 0 : i32
    %c0_i32_0 = arith.constant 0 : i32
    %c0_i32_1 = arith.constant 0 : i32
    return %arg0, %c0_i32, %c0_i32_0 : i32, i32, i32
  }
  func.func @transform_3(%arg0: i32, %arg1: i32) -> (i32, i32, i32) {
    %c0_i32 = arith.constant 0 : i32
    %c0_i32_0 = arith.constant 0 : i32
    %c0_i32_1 = arith.constant 0 : i32
    return %arg0, %c0_i32, %c0_i32_0 : i32, i32, i32
  }
  func.func @transform_4(%arg0: i32, %arg1: i32) -> (i32, i32, i32) {
    %c0_i32 = arith.constant 0 : i32
    %c0_i32_0 = arith.constant 0 : i32
    %c0_i32_1 = arith.constant 0 : i32
    return %arg0, %c0_i32, %c0_i32_0 : i32, i32, i32
  }
  func.func @transform_5(%arg0: i32, %arg1: i32) -> (i32, i32, i32) {
    %c0_i32 = arith.constant 0 : i32
    %c0_i32_0 = arith.constant 0 : i32
    %c0_i32_1 = arith.constant 0 : i32
    return %arg0, %c0_i32, %c0_i32_0 : i32, i32, i32
  }
  func.func @transform_6(%arg0: i32, %arg1: i32) -> (i32, i32, i32) {
    %c0_i32 = arith.constant 0 : i32
    %c0_i32_0 = arith.constant 0 : i32
    %c0_i32_1 = arith.constant 0 : i32
    return %arg0, %c0_i32, %c0_i32_0 : i32, i32, i32
  }
  func.func @transform_7(%arg0: i32, %arg1: i32) -> (i32, i32, i32) {
    %c0_i32 = arith.constant 0 : i32
    %c0_i32_0 = arith.constant 0 : i32
    %c0_i32_1 = arith.constant 0 : i32
    return %arg0, %c0_i32, %c0_i32_0 : i32, i32, i32
  }
  func.func @transform_8(%arg0: i32, %arg1: i32) -> (i32, i32, i32) {
    %c0_i32 = arith.constant 0 : i32
    %c0_i32_0 = arith.constant 0 : i32
    %c0_i32_1 = arith.constant 0 : i32
    return %arg0, %c0_i32, %c0_i32_0 : i32, i32, i32
  }
  func.func @transform_9(%arg0: i32, %arg1: i32) -> (i32, i32, i32) {
    %c0_i32 = arith.constant 0 : i32
    %c0_i32_0 = arith.constant 0 : i32
    %c0_i32_1 = arith.constant 0 : i32
    return %arg0, %c0_i32, %c0_i32_0 : i32, i32, i32
  }
  func.func @transform_10(%arg0: i32, %arg1: i32) -> (i32, i32, i32) {
    %c0_i32 = arith.constant 0 : i32
    %c0_i32_0 = arith.constant 0 : i32
    %c0_i32_1 = arith.constant 0 : i32
    return %arg0, %c0_i32, %c0_i32_0 : i32, i32, i32
  }
  func.func @transform_11(%arg0: i32, %arg1: i32) -> (i32, i32, i32) {
    %c0_i32 = arith.constant 0 : i32
    %c0_i32_0 = arith.constant 0 : i32
    %c0_i32_1 = arith.constant 0 : i32
    return %arg0, %c0_i32, %c0_i32_0 : i32, i32, i32
  }
  func.func @transform_12(%arg0: i32, %arg1: i32) -> (i32, i32, i32) {
    %c0_i32 = arith.constant 0 : i32
    %c0_i32_0 = arith.constant 0 : i32
    %c0_i32_1 = arith.constant 0 : i32
    return %arg0, %c0_i32, %c0_i32_0 : i32, i32, i32
  }
  func.func @transform_13(%arg0: i32, %arg1: i32) -> (i32, i32, i32) {
    %c0_i32 = arith.constant 0 : i32
    %c0_i32_0 = arith.constant 0 : i32
    %c0_i32_1 = arith.constant 0 : i32
    return %arg1, %c0_i32, %c0_i32_0 : i32, i32, i32
  }
}

</mosaic_0001>

<llo_original>
// kernel: tpu_custom_call.1
$region0: #{tpu_custom_call.1}
  #allocation0 [shape = 'u32[]', space=smem, size = 0x4, offset = 0x4, fixed_abs, tag = 'smem constant byte address 0x4 - core index']
  #allocation1 [shape = 'u32[144,128]{1,0:T(1,128)}', space=vmem, size = 0x12000, scoped, tag = 'internal scratch']
  #allocation2 [shape = 'f32[2,8,32]{2,1,0:T(8,128)}', space=vmem, size = 0x2000, scoped, tag = 'scratch operand']
  %s0 = inlined_call_operand.vmem [shape: f32[2,8,32], index: 0, kind: input, shape index: {}]
  %s1 = inlined_call_operand.vmem [shape: f32[2,1,32], index: 1, kind: input, shape index: {}]
  %s2 = inlined_call_operand.vmem [shape: f32[2,1,32], index: 2, kind: input, shape index: {}]
  %s3 = inlined_call_operand.vmem [shape: bf16[2,32,96], index: 3, kind: input, shape index: {}]
  %s4 = inlined_call_operand.vmem [shape: f32[2,1,96], index: 4, kind: input, shape index: {}]
  %s5 = inlined_call_operand.vmem [shape: bf16[2,32,32], index: 5, kind: input, shape index: {}]
  %s6 = inlined_call_operand.vmem [shape: f32[2,1,32], index: 6, kind: input, shape index: {}]
  %s7 = inlined_call_operand.vmem [shape: f32[2,1,32], index: 7, kind: input, shape index: {}]
  %s8 = inlined_call_operand.vmem [shape: f32[2,1,32], index: 8, kind: input, shape index: {}]
  %s9 = inlined_call_operand.vmem [shape: bf16[2,32,128], index: 9, kind: input, shape index: {}]
  %s10 = inlined_call_operand.vmem [shape: f32[2,1,128], index: 10, kind: input, shape index: {}]
  %s11 = inlined_call_operand.vmem [shape: bf16[2,128,32], index: 11, kind: input, shape index: {}]
  %s12 = inlined_call_operand.vmem [shape: f32[2,1,32], index: 12, kind: input, shape index: {}]
  %s13 = inlined_call_operand.hbm [shape: f32[2,8,32], index: 13, kind: output, shape index: {}]
  %s14 = sld [smem:[#allocation0]]
  $region89: #{tpu_custom_call.1} parent=0
    _
  %s16 = ssub.s32 1, %s14
  %s17 = scalar_select 0, %s16, %s14
  $region1: #{tpu_custom_call.1} parent=0
    #allocation3 [shape = 'u8[8192]{0}', space=vmem, size = 0x2000, scoped, tag = 'output window, operand 0']
    #allocation4 [shape = 's32[2]{0}', space=sflag, size = 0x8, scoped, tag = 'scoped memory for tpu_custom_call.1']
    %18 = vsyncpa [#allocation4], 0
    %s19 = scalar_lea.sflag [#allocation4], 1
    %20 = vsyncpa %s19, 0
    loop: start=0, step=1, limit=6
    $region2: #{tpu_custom_call.1} parent=1 // loop_pre_header
      _
    $region3: #{tpu_custom_call.1} parent=1 // loop_header
      %s22 = sphi 0, %s26
      %p23 = scmp.ge.s32.totalorder %s22, 6
      %s29 = sphi 0, %s41
      %s30 = sphi 0, %s37
      %s31 = sphi 0, %s29
      %s32 = sphi 0, %s30
      %s33 = sphi 0, %s31
      %s34 = sphi 0, %s32
      %s44 = sphi 0, %s46
      %s47 = sphi 0, %s44
      %s48 = sphi 0, %s47
      %s64 = sphi 0, %s48
      %s70 = sphi 0, %s72
      %s73 = sphi 0, %s70
      %s74 = sphi 0, %s73
      %s90 = sphi 0, %s74
      %s96 = sphi 0, %s98
      %s99 = sphi 0, %s96
      %s100 = sphi 0, %s99
      %s116 = sphi 0, %s100
      %s122 = sphi 0, %s124
      %s125 = sphi 0, %s122
      %s126 = sphi 0, %s125
      %s142 = sphi 0, %s126
      %s148 = sphi 0, %s150
      %s151 = sphi 0, %s148
      %s152 = sphi 0, %s151
      %s168 = sphi 0, %s152
      %s174 = sphi 0, %s176
      %s177 = sphi 0, %s174
      %s178 = sphi 0, %s177
      %s194 = sphi 0, %s178
      %s200 = sphi 0, %s202
      %s203 = sphi 0, %s200
      %s204 = sphi 0, %s203
      %s220 = sphi 0, %s204
      %s226 = sphi 0, %s228
      %s229 = sphi 0, %s226
      %s230 = sphi 0, %s229
      %s246 = sphi 0, %s230
      %s252 = sphi 0, %s254
      %s255 = sphi 0, %s252
      %s256 = sphi 0, %s255
      %s272 = sphi 0, %s256
      %s278 = sphi 0, %s280
      %s281 = sphi 0, %s278
      %s282 = sphi 0, %s281
      %s298 = sphi 0, %s282
      %s304 = sphi 0, %s306
      %s307 = sphi 0, %s304
      %s308 = sphi 0, %s307
      %s324 = sphi 0, %s308
      %s330 = sphi 0, %s332
      %s333 = sphi 0, %s330
      %s334 = sphi 0, %s333
      %s350 = sphi 0, %s334
      %s356 = sphi 0, %s358
      %s359 = sphi 0, %s356
      %s360 = sphi 0, %s359
      %s376 = sphi 0, %s360
      %s382 = sphi 0, %s384
      %s385 = sphi 0, %s382
      %s386 = sphi 0, %s385
      %s402 = sphi 0, %s386
    $region4: #{tpu_custom_call.1} parent=1 // loop_header_branch
      %25 = sbr.rel (%p23) target = $region8
    $region5: #{tpu_custom_call.1} parent=1 // loop_body
      %s27 = ssub.s32 %s22, 1
      %s28 = ssub.s32 %s22, 2
      %s35 = sadd.s32 1, %s30
      %p36 = scmp.ge.s32.totalorder %s35, 2
      %s37 = scalar_select %p36, 0, %s35
      %s38 = sadd.s32 1, %s29
      %s39 = scalar_select %p36, %s38, %s29
      %p40 = scmp.ge.s32.totalorder %s39, 2
      %s41 = scalar_select %p40, 0, %s39
      %s42 = ssub.s32 %s30, %s37
      %p43 = scmp.eq.s32.totalorder %s42, 0
      %s45 = sadd.s32 %s44, 1
      %s46 = scalar_select %p43, %s44, %s45
      %p49 = pneg %p43
      %p50 = scmp.eq.s32.totalorder %s22, 3
      %p51 = por %p49, %p50
      %p52 = scmp.ne.s32.totalorder %s44, %s47
      %p53 = scmp.eq.s32.totalorder %s22, 0
      %p54 = por %p52, %p53
      %p55 = scmp.ne.s32.totalorder %s44, %s47
      %p56 = scmp.eq.s32.totalorder %s27, 3
      %p57 = por %p55, %p56
      %p58 = scmp.ne.s32.totalorder %s47, %s48
      %p59 = scmp.eq.s32.totalorder %s27, 0
      %p60 = por %p58, %p59
      %p61 = scmp.ne.s32.totalorder %s47, %s48
      %p62 = scmp.eq.s32.totalorder %s28, 3
      %p63 = por %p61, %p62
      %p65 = scmp.ne.s32.totalorder %s48, %s64
      %p66 = scmp.eq.s32.totalorder %s28, 0
      %p67 = por %p65, %p66
      %s68 = ssub.s32 %s29, %s41
      %p69 = scmp.eq.s32.totalorder %s68, 0
      %s71 = sadd.s32 %s70, 1
      %s72 = scalar_select %p69, %s70, %s71
      %p75 = pneg %p69
      %p76 = scmp.eq.s32.totalorder %s22, 3
      %p77 = por %p75, %p76
      %p78 = scmp.ne.s32.totalorder %s70, %s73
      %p79 = scmp.eq.s32.totalorder %s22, 0
      %p80 = por %p78, %p79
      %p81 = scmp.ne.s32.totalorder %s70, %s73
      %p82 = scmp.eq.s32.totalorder %s27, 3
      %p83 = por %p81, %p82
      %p84 = scmp.ne.s32.totalorder %s73, %s74
      %p85 = scmp.eq.s32.totalorder %s27, 0
      %p86 = por %p84, %p85
      %p87 = scmp.ne.s32.totalorder %s73, %s74
      %p88 = scmp.eq.s32.totalorder %s28, 3
      %p89 = por %p87, %p88
      %p91 = scmp.ne.s32.totalorder %s74, %s90
      %p92 = scmp.eq.s32.totalorder %s28, 0
      %p93 = por %p91, %p92
      %s94 = ssub.s32 %s29, %s41
      %p95 = scmp.eq.s32.totalorder %s94, 0
      %s97 = sadd.s32 %s96, 1
      %s98 = scalar_select %p95, %s96, %s97
      %p101 = pneg %p95
      %p102 = scmp.eq.s32.totalorder %s22, 3
      %p103 = por %p101, %p102
      %p104 = scmp.ne.s32.totalorder %s96, %s99
      %p105 = scmp.eq.s32.totalorder %s22, 0
      %p106 = por %p104, %p105
      %p107 = scmp.ne.s32.totalorder %s96, %s99
      %p108 = scmp.eq.s32.totalorder %s27, 3
      %p109 = por %p107, %p108
      %p110 = scmp.ne.s32.totalorder %s99, %s100
      %p111 = scmp.eq.s32.totalorder %s27, 0
      %p112 = por %p110, %p111
      %p113 = scmp.ne.s32.totalorder %s99, %s100
      %p114 = scmp.eq.s32.totalorder %s28, 3
      %p115 = por %p113, %p114
      %p117 = scmp.ne.s32.totalorder %s100, %s116
      %p118 = scmp.eq.s32.totalorder %s28, 0
      %p119 = por %p117, %p118
      %s120 = ssub.s32 %s29, %s41
      %p121 = scmp.eq.s32.totalorder %s120, 0
      %s123 = sadd.s32 %s122, 1
      %s124 = scalar_select %p121, %s122, %s123
      %p127 = pneg %p121
      %p128 = scmp.eq.s32.totalorder %s22, 3
      %p129 = por %p127, %p128
      %p130 = scmp.ne.s32.totalorder %s122, %s125
      %p131 = scmp.eq.s32.totalorder %s22, 0
      %p132 = por %p130, %p131
      %p133 = scmp.ne.s32.totalorder %s122, %s125
      %p134 = scmp.eq.s32.totalorder %s27, 3
      %p135 = por %p133, %p134
      %p136 = scmp.ne.s32.totalorder %s125, %s126
      %p137 = scmp.eq.s32.totalorder %s27, 0
      %p138 = por %p136, %p137
      %p139 = scmp.ne.s32.totalorder %s125, %s126
      %p140 = scmp.eq.s32.totalorder %s28, 3
      %p141 = por %p139, %p140
      %p143 = scmp.ne.s32.totalorder %s126, %s142
      %p144 = scmp.eq.s32.totalorder %s28, 0
      %p145 = por %p143, %p144
      %s146 = ssub.s32 %s29, %s41
      %p147 = scmp.eq.s32.totalorder %s146, 0
      %s149 = sadd.s32 %s148, 1
      %s150 = scalar_select %p147, %s148, %s149
      %p153 = pneg %p147
      %p154 = scmp.eq.s32.totalorder %s22, 3
      %p155 = por %p153, %p154
      %p156 = scmp.ne.s32.totalorder %s148, %s151
      %p157 = scmp.eq.s32.totalorder %s22, 0
      %p158 = por %p156, %p157
      %p159 = scmp.ne.s32.totalorder %s148, %s151
      %p160 = scmp.eq.s32.totalorder %s27, 3
      %p161 = por %p159, %p160
      %p162 = scmp.ne.s32.totalorder %s151, %s152
      %p163 = scmp.eq.s32.totalorder %s27, 0
      %p164 = por %p162, %p163
      %p165 = scmp.ne.s32.totalorder %s151, %s152
      %p166 = scmp.eq.s32.totalorder %s28, 3
      %p167 = por %p165, %p166
      %p169 = scmp.ne.s32.totalorder %s152, %s168
      %p170 = scmp.eq.s32.totalorder %s28, 0
      %p171 = por %p169, %p170
      %s172 = ssub.s32 %s29, %s41
      %p173 = scmp.eq.s32.totalorder %s172, 0
      %s175 = sadd.s32 %s174, 1
      %s176 = scalar_select %p173, %s174, %s175
      %p179 = pneg %p173
      %p180 = scmp.eq.s32.totalorder %s22, 3
      %p181 = por %p179, %p180
      %p182 = scmp.ne.s32.totalorder %s174, %s177
      %p183 = scmp.eq.s32.totalorder %s22, 0
      %p184 = por %p182, %p183
      %p185 = scmp.ne.s32.totalorder %s174, %s177
      %p186 = scmp.eq.s32.totalorder %s27, 3
      %p187 = por %p185, %p186
      %p188 = scmp.ne.s32.totalorder %s177, %s178
      %p189 = scmp.eq.s32.totalorder %s27, 0
      %p190 = por %p188, %p189
      %p191 = scmp.ne.s32.totalorder %s177, %s178
      %p192 = scmp.eq.s32.totalorder %s28, 3
      %p193 = por %p191, %p192
      %p195 = scmp.ne.s32.totalorder %s178, %s194
      %p196 = scmp.eq.s32.totalorder %s28, 0
      %p197 = por %p195, %p196
      %s198 = ssub.s32 %s29, %s41
      %p199 = scmp.eq.s32.totalorder %s198, 0
      %s201 = sadd.s32 %s200, 1
      %s202 = scalar_select %p199, %s200, %s201
      %p205 = pneg %p199
      %p206 = scmp.eq.s32.totalorder %s22, 3
      %p207 = por %p205, %p206
      %p208 = scmp.ne.s32.totalorder %s200, %s203
      %p209 = scmp.eq.s32.totalorder %s22, 0
      %p210 = por %p208, %p209
      %p211 = scmp.ne.s32.totalorder %s200, %s203
      %p212 = scmp.eq.s32.totalorder %s27, 3
      %p213 = por %p211, %p212
      %p214 = scmp.ne.s32.totalorder %s203, %s204
      %p215 = scmp.eq.s32.totalorder %s27, 0
      %p216 = por %p214, %p215
      %p217 = scmp.ne.s32.totalorder %s203, %s204
      %p218 = scmp.eq.s32.totalorder %s28, 3
      %p219 = por %p217, %p218
      %p221 = scmp.ne.s32.totalorder %s204, %s220
      %p222 = scmp.eq.s32.totalorder %s28, 0
      %p223 = por %p221, %p222
      %s224 = ssub.s32 %s29, %s41
      %p225 = scmp.eq.s32.totalorder %s224, 0
      %s227 = sadd.s32 %s226, 1
      %s228 = scalar_select %p225, %s226, %s227
      %p231 = pneg %p225
      %p232 = scmp.eq.s32.totalorder %s22, 3
      %p233 = por %p231, %p232
      %p234 = scmp.ne.s32.totalorder %s226, %s229
      %p235 = scmp.eq.s32.totalorder %s22, 0
      %p236 = por %p234, %p235
      %p237 = scmp.ne.s32.totalorder %s226, %s229
      %p238 = scmp.eq.s32.totalorder %s27, 3
      %p239 = por %p237, %p238
      %p240 = scmp.ne.s32.totalorder %s229, %s230
      %p241 = scmp.eq.s32.totalorder %s27, 0
      %p242 = por %p240, %p241
      %p243 = scmp.ne.s32.totalorder %s229, %s230
      %p244 = scmp.eq.s32.totalorder %s28, 3
      %p245 = por %p243, %p244
      %p247 = scmp.ne.s32.totalorder %s230, %s246
      %p248 = scmp.eq.s32.totalorder %s28, 0
      %p249 = por %p247, %p248
      %s250 = ssub.s32 %s29, %s41
      %p251 = scmp.eq.s32.totalorder %s250, 0
      %s253 = sadd.s32 %s252, 1
      %s254 = scalar_select %p251, %s252, %s253
      %p257 = pneg %p251
      %p258 = scmp.eq.s32.totalorder %s22, 3
      %p259 = por %p257, %p258
      %p260 = scmp.ne.s32.totalorder %s252, %s255
      %p261 = scmp.eq.s32.totalorder %s22, 0
      %p262 = por %p260, %p261
      %p263 = scmp.ne.s32.totalorder %s252, %s255
      %p264 = scmp.eq.s32.totalorder %s27, 3
      %p265 = por %p263, %p264
      %p266 = scmp.ne.s32.totalorder %s255, %s256
      %p267 = scmp.eq.s32.totalorder %s27, 0
      %p268 = por %p266, %p267
      %p269 = scmp.ne.s32.totalorder %s255, %s256
      %p270 = scmp.eq.s32.totalorder %s28, 3
      %p271 = por %p269, %p270
      %p273 = scmp.ne.s32.totalorder %s256, %s272
      %p274 = scmp.eq.s32.totalorder %s28, 0
      %p275 = por %p273, %p274
      %s276 = ssub.s32 %s29, %s41
      %p277 = scmp.eq.s32.totalorder %s276, 0
      %s279 = sadd.s32 %s278, 1
      %s280 = scalar_select %p277, %s278, %s279
      %p283 = pneg %p277
      %p284 = scmp.eq.s32.totalorder %s22, 3
      %p285 = por %p283, %p284
      %p286 = scmp.ne.s32.totalorder %s278, %s281
      %p287 = scmp.eq.s32.totalorder %s22, 0
      %p288 = por %p286, %p287
      %p289 = scmp.ne.s32.totalorder %s278, %s281
      %p290 = scmp.eq.s32.totalorder %s27, 3
      %p291 = por %p289, %p290
      %p292 = scmp.ne.s32.totalorder %s281, %s282
      %p293 = scmp.eq.s32.totalorder %s27, 0
      %p294 = por %p292, %p293
      %p295 = scmp.ne.s32.totalorder %s281, %s282
      %p296 = scmp.eq.s32.totalorder %s28, 3
      %p297 = por %p295, %p296
      %p299 = scmp.ne.s32.totalorder %s282, %s298
      %p300 = scmp.eq.s32.totalorder %s28, 0
      %p301 = por %p299, %p300
      %s302 = ssub.s32 %s29, %s41
      %p303 = scmp.eq.s32.totalorder %s302, 0
      %s305 = sadd.s32 %s304, 1
      %s306 = scalar_select %p303, %s304, %s305
      %p309 = pneg %p303
      %p310 = scmp.eq.s32.totalorder %s22, 3
      %p311 = por %p309, %p310
      %p312 = scmp.ne.s32.totalorder %s304, %s307
      %p313 = scmp.eq.s32.totalorder %s22, 0
      %p314 = por %p312, %p313
      %p315 = scmp.ne.s32.totalorder %s304, %s307
      %p316 = scmp.eq.s32.totalorder %s27, 3
      %p317 = por %p315, %p316
      %p318 = scmp.ne.s32.totalorder %s307, %s308
      %p319 = scmp.eq.s32.totalorder %s27, 0
      %p320 = por %p318, %p319
      %p321 = scmp.ne.s32.totalorder %s307, %s308
      %p322 = scmp.eq.s32.totalorder %s28, 3
      %p323 = por %p321, %p322
      %p325 = scmp.ne.s32.totalorder %s308, %s324
      %p326 = scmp.eq.s32.totalorder %s28, 0
      %p327 = por %p325, %p326
      %s328 = ssub.s32 %s29, %s41
      %p329 = scmp.eq.s32.totalorder %s328, 0
      %s331 = sadd.s32 %s330, 1
      %s332 = scalar_select %p329, %s330, %s331
      %p335 = pneg %p329
      %p336 = scmp.eq.s32.totalorder %s22, 3
      %p337 = por %p335, %p336
      %p338 = scmp.ne.s32.totalorder %s330, %s333
      %p339 = scmp.eq.s32.totalorder %s22, 0
      %p340 = por %p338, %p339
      %p341 = scmp.ne.s32.totalorder %s330, %s333
      %p342 = scmp.eq.s32.totalorder %s27, 3
      %p343 = por %p341, %p342
      %p344 = scmp.ne.s32.totalorder %s333, %s334
      %p345 = scmp.eq.s32.totalorder %s27, 0
      %p346 = por %p344, %p345
      %p347 = scmp.ne.s32.totalorder %s333, %s334
      %p348 = scmp.eq.s32.totalorder %s28, 3
      %p349 = por %p347, %p348
      %p351 = scmp.ne.s32.totalorder %s334, %s350
      %p352 = scmp.eq.s32.totalorder %s28, 0
      %p353 = por %p351, %p352
      %s354 = ssub.s32 %s29, %s41
      %p355 = scmp.eq.s32.totalorder %s354, 0
      %s357 = sadd.s32 %s356, 1
      %s358 = scalar_select %p355, %s356, %s357
      %p361 = pneg %p355
      %p362 = scmp.eq.s32.totalorder %s22, 3
      %p363 = por %p361, %p362
      %p364 = scmp.ne.s32.totalorder %s356, %s359
      %p365 = scmp.eq.s32.totalorder %s22, 0
      %p366 = por %p364, %p365
      %p367 = scmp.ne.s32.totalorder %s356, %s359
      %p368 = scmp.eq.s32.totalorder %s27, 3
      %p369 = por %p367, %p368
      %p370 = scmp.ne.s32.totalorder %s359, %s360
      %p371 = scmp.eq.s32.totalorder %s27, 0
      %p372 = por %p370, %p371
      %p373 = scmp.ne.s32.totalorder %s359, %s360
      %p374 = scmp.eq.s32.totalorder %s28, 3
      %p375 = por %p373, %p374
      %p377 = scmp.ne.s32.totalorder %s360, %s376
      %p378 = scmp.eq.s32.totalorder %s28, 0
      %p379 = por %p377, %p378
      %s380 = ssub.s32 %s30, %s37
      %p381 = scmp.eq.s32.totalorder %s380, 0
      %s383 = sadd.s32 %s382, 1
      %s384 = scalar_select %p381, %s382, %s383
      %p387 = pneg %p381
      %p388 = scmp.eq.s32.totalorder %s22, 3
      %p389 = por %p387, %p388
      %p390 = scmp.ne.s32.totalorder %s382, %s385
      %p391 = scmp.eq.s32.totalorder %s22, 0
      %p392 = por %p390, %p391
      %p393 = scmp.ne.s32.totalorder %s382, %s385
      %p394 = scmp.eq.s32.totalorder %s27, 3
      %p395 = por %p393, %p394
      %p396 = scmp.ne.s32.totalorder %s385, %s386
      %p397 = scmp.eq.s32.totalorder %s27, 0
      %p398 = por %p396, %p397
      %p399 = scmp.ne.s32.totalorder %s385, %s386
      %p400 = scmp.eq.s32.totalorder %s28, 3
      %p401 = por %p399, %p400
      %p403 = scmp.ne.s32.totalorder %s386, %s402
      %p404 = scmp.eq.s32.totalorder %s28, 0
      %p405 = por %p403, %p404
      %p406 = scmp.le.s32.totalorder 1, %s22
      %p407 = scmp.lt.s32.totalorder %s22, 5
      %p408 = pnand %p406, %p407
      %p409 = pneg %p408
      // Predicated region
      $region9: #{tpu_custom_call.1} parent=5 // pred_check
        _
      $region10: #{tpu_custom_call.1} parent=5 // pred_check_branch
        %411 = sbr.rel (%p408) target = $region12
      $region11: #{tpu_custom_call.1} parent=5 // pred_region
        %s412 = ssub.s32 %s22, 1
      $region12: #{tpu_custom_call.1} parent=5 // pred_fallthru
        _
      %p413 = scmp.lt.s32.totalorder %s22, 4
      // Predicated region
      $region13: #{tpu_custom_call.1} parent=5 // pred_check
        %p414 = pneg %p413
      $region14: #{tpu_custom_call.1} parent=5 // pred_check_branch
        %416 = sbr.rel (%p414) target = $region16
      $region15: #{tpu_custom_call.1} parent=5 // pred_region
        // Predicated region
        $region17: #{tpu_custom_call.1} parent=15 // pred_check
          %p417 = pneg %p54
        $region18: #{tpu_custom_call.1} parent=15 // pred_check_branch
          %419 = sbr.rel (%p417) target = $region20
        $region19: #{tpu_custom_call.1} parent=15 // pred_region
          %p420 = scmp.lt.s32.totalorder %s30, 1
          %s421 = scalar_select %p420, %s30, 1
          %s422 = smul.addr %s421, 8
          %s423 = scalar_lea.vmem %s0, %s422
        $region20: #{tpu_custom_call.1} parent=15 // pred_fallthru
          _
        // Predicated region
        $region21: #{tpu_custom_call.1} parent=15 // pred_check
          %p424 = pneg %p80
        $region22: #{tpu_custom_call.1} parent=15 // pred_check_branch
          %426 = sbr.rel (%p424) target = $region24
        $region23: #{tpu_custom_call.1} parent=15 // pred_region
          %p427 = scmp.lt.s32.totalorder %s29, 1
          %s428 = scalar_select %p427, %s29, 1
          %s429 = scalar_lea.vmem %s1, %s428
        $region24: #{tpu_custom_call.1} parent=15 // pred_fallthru
          _
        // Predicated region
        $region25: #{tpu_custom_call.1} parent=15 // pred_check
          %p430 = pneg %p106
        $region26: #{tpu_custom_call.1} parent=15 // pred_check_branch
          %432 = sbr.rel (%p430) target = $region28
        $region27: #{tpu_custom_call.1} parent=15 // pred_region
          %p433 = scmp.lt.s32.totalorder %s29, 1
          %s434 = scalar_select %p433, %s29, 1
          %s435 = scalar_lea.vmem %s2, %s434
        $region28: #{tpu_custom_call.1} parent=15 // pred_fallthru
          _
        // Predicated region
        $region29: #{tpu_custom_call.1} parent=15 // pred_check
          %p436 = pneg %p132
        $region30: #{tpu_custom_call.1} parent=15 // pred_check_branch
          %438 = sbr.rel (%p436) target = $region32
        $region31: #{tpu_custom_call.1} parent=15 // pred_region
          %p439 = scmp.lt.s32.totalorder %s29, 1
          %s440 = scalar_select %p439, %s29, 1
          %s441 = smul.addr %s440, 4
          %s442 = smul.addr %s441, 4
          %s443 = scalar_lea.vmem %s3, %s442
        $region32: #{tpu_custom_call.1} parent=15 // pred_fallthru
          _
        // Predicated region
        $region33: #{tpu_custom_call.1} parent=15 // pred_check
          %p444 = pneg %p158
        $region34: #{tpu_custom_call.1} parent=15 // pred_check_branch
          %446 = sbr.rel (%p444) target = $region36
        $region35: #{tpu_custom_call.1} parent=15 // pred_region
          %p447 = scmp.lt.s32.totalorder %s29, 1
          %s448 = scalar_select %p447, %s29, 1
          %s449 = scalar_lea.vmem %s4, %s448
        $region36: #{tpu_custom_call.1} parent=15 // pred_fallthru
          _
        // Predicated region
        $region37: #{tpu_custom_call.1} parent=15 // pred_check
          %p450 = pneg %p184
        $region38: #{tpu_custom_call.1} parent=15 // pred_check_branch
          %452 = sbr.rel (%p450) target = $region40
        $region39: #{tpu_custom_call.1} parent=15 // pred_region
          %p453 = scmp.lt.s32.totalorder %s29, 1
          %s454 = scalar_select %p453, %s29, 1
          %s455 = smul.addr %s454, 4
          %s456 = smul.addr %s455, 4
          %s457 = scalar_lea.vmem %s5, %s456
        $region40: #{tpu_custom_call.1} parent=15 // pred_fallthru
          _
        // Predicated region
        $region41: #{tpu_custom_call.1} parent=15 // pred_check
          %p458 = pneg %p210
        $region42: #{tpu_custom_call.1} parent=15 // pred_check_branch
          %460 = sbr.rel (%p458) target = $region44
        $region43: #{tpu_custom_call.1} parent=15 // pred_region
          %p461 = scmp.lt.s32.totalorder %s29, 1
          %s462 = scalar_select %p461, %s29, 1
          %s463 = scalar_lea.vmem %s6, %s462
        $region44: #{tpu_custom_call.1} parent=15 // pred_fallthru
          _
        // Predicated region
        $region45: #{tpu_custom_call.1} parent=15 // pred_check
          %p464 = pneg %p236
        $region46: #{tpu_custom_call.1} parent=15 // pred_check_branch
          %466 = sbr.rel (%p464) target = $region48
        $region47: #{tpu_custom_call.1} parent=15 // pred_region
          %p467 = scmp.lt.s32.totalorder %s29, 1
          %s468 = scalar_select %p467, %s29, 1
          %s469 = scalar_lea.vmem %s7, %s468
        $region48: #{tpu_custom_call.1} parent=15 // pred_fallthru
          _
        // Predicated region
        $region49: #{tpu_custom_call.1} parent=15 // pred_check
          %p470 = pneg %p262
        $region50: #{tpu_custom_call.1} parent=15 // pred_check_branch
          %472 = sbr.rel (%p470) target = $region52
        $region51: #{tpu_custom_call.1} parent=15 // pred_region
          %p473 = scmp.lt.s32.totalorder %s29, 1
          %s474 = scalar_select %p473, %s29, 1
          %s475 = scalar_lea.vmem %s8, %s474
        $region52: #{tpu_custom_call.1} parent=15 // pred_fallthru
          _
        // Predicated region
        $region53: #{tpu_custom_call.1} parent=15 // pred_check
          %p476 = pneg %p288
        $region54: #{tpu_custom_call.1} parent=15 // pred_check_branch
          %478 = sbr.rel (%p476) target = $region56
        $region55: #{tpu_custom_call.1} parent=15 // pred_region
          %p479 = scmp.lt.s32.totalorder %s29, 1
          %s480 = scalar_select %p479, %s29, 1
          %s481 = smul.addr %s480, 4
          %s482 = smul.addr %s481, 4
          %s483 = scalar_lea.vmem %s9, %s482
        $region56: #{tpu_custom_call.1} parent=15 // pred_fallthru
          _
        // Predicated region
        $region57: #{tpu_custom_call.1} parent=15 // pred_check
          %p484 = pneg %p314
        $region58: #{tpu_custom_call.1} parent=15 // pred_check_branch
          %486 = sbr.rel (%p484) target = $region60
        $region59: #{tpu_custom_call.1} parent=15 // pred_region
          %p487 = scmp.lt.s32.totalorder %s29, 1
          %s488 = scalar_select %p487, %s29, 1
          %s489 = scalar_lea.vmem %s10, %s488
        $region60: #{tpu_custom_call.1} parent=15 // pred_fallthru
          _
        // Predicated region
        $region61: #{tpu_custom_call.1} parent=15 // pred_check
          %p490 = pneg %p340
        $region62: #{tpu_custom_call.1} parent=15 // pred_check_branch
          %492 = sbr.rel (%p490) target = $region64
        $region63: #{tpu_custom_call.1} parent=15 // pred_region
          %p493 = scmp.lt.s32.totalorder %s29, 1
          %s494 = scalar_select %p493, %s29, 1
          %s495 = smul.addr %s494, 16
          %s496 = smul.addr %s495, 4
          %s497 = scalar_lea.vmem %s11, %s496
        $region64: #{tpu_custom_call.1} parent=15 // pred_fallthru
          _
        // Predicated region
        $region65: #{tpu_custom_call.1} parent=15 // pred_check
          %p498 = pneg %p366
        $region66: #{tpu_custom_call.1} parent=15 // pred_check_branch
          %500 = sbr.rel (%p498) target = $region68
        $region67: #{tpu_custom_call.1} parent=15 // pred_region
          %p501 = scmp.lt.s32.totalorder %s29, 1
          %s502 = scalar_select %p501, %s29, 1
          %s503 = scalar_lea.vmem %s12, %s502
        $region68: #{tpu_custom_call.1} parent=15 // pred_fallthru
          _
      $region16: #{tpu_custom_call.1} parent=5 // pred_fallthru
        _
      %p504 = scmp.le.s32.totalorder 1, %s22
      %p505 = scmp.lt.s32.totalorder %s22, 5
      %p506 = pnand %p504, %p505
      %p507 = pneg %p506
      // Predicated region
      $region69: #{tpu_custom_call.1} parent=5 // pred_check
        _
      $region70: #{tpu_custom_call.1} parent=5 // pred_check_branch
        %509 = sbr.rel (%p506) target = $region72
      $region71: #{tpu_custom_call.1} parent=5 // pred_region
        %s510 = ssub.s32 %s22, 1
        %p511 = scmp.lt.s32.totalorder %s32, 1
        %s512 = scalar_select %p511, %s32, 1
        %s513 = smul.addr %s512, 8
        %s514 = scalar_lea.vmem %s0, %s513
        %p515 = pneg %p60
        %p516 = pneg %p57
        %p517 = scmp.lt.s32.totalorder %s31, 1
        %s518 = scalar_select %p517, %s31, 1
        %s519 = scalar_lea.vmem %s1, %s518
        %p520 = pneg %p86
        %p521 = pneg %p83
        %p522 = scmp.lt.s32.totalorder %s31, 1
        %s523 = scalar_select %p522, %s31, 1
        %s524 = scalar_lea.vmem %s2, %s523
        %p525 = pneg %p112
        %p526 = pneg %p109
        %p527 = scmp.lt.s32.totalorder %s31, 1
        %s528 = scalar_select %p527, %s31, 1
        %s529 = smul.addr %s528, 4
        %s530 = smul.addr %s529, 4
        %s531 = scalar_lea.vmem %s3, %s530
        %p532 = pneg %p138
        %p533 = pneg %p135
        %p534 = scmp.lt.s32.totalorder %s31, 1
        %s535 = scalar_select %p534, %s31, 1
        %s536 = scalar_lea.vmem %s4, %s535
        %p537 = pneg %p164
        %p538 = pneg %p161
        %p539 = scmp.lt.s32.totalorder %s31, 1
        %s540 = scalar_select %p539, %s31, 1
        %s541 = smul.addr %s540, 4
        %s542 = smul.addr %s541, 4
        %s543 = scalar_lea.vmem %s5, %s542
        %p544 = pneg %p190
        %p545 = pneg %p187
        %p546 = scmp.lt.s32.totalorder %s31, 1
        %s547 = scalar_select %p546, %s31, 1
        %s548 = scalar_lea.vmem %s6, %s547
        %p549 = pneg %p216
        %p550 = pneg %p213
        %p551 = scmp.lt.s32.totalorder %s31, 1
        %s552 = scalar_select %p551, %s31, 1
        %s553 = scalar_lea.vmem %s7, %s552
        %p554 = pneg %p242
        %p555 = pneg %p239
        %p556 = scmp.lt.s32.totalorder %s31, 1
        %s557 = scalar_select %p556, %s31, 1
        %s558 = scalar_lea.vmem %s8, %s557
        %p559 = pneg %p268
        %p560 = pneg %p265
        %p561 = scmp.lt.s32.totalorder %s31, 1
        %s562 = scalar_select %p561, %s31, 1
        %s563 = smul.addr %s562, 4
        %s564 = smul.addr %s563, 4
        %s565 = scalar_lea.vmem %s9, %s564
        %p566 = pneg %p294
        %p567 = pneg %p291
        %p568 = scmp.lt.s32.totalorder %s31, 1
        %s569 = scalar_select %p568, %s31, 1
        %s570 = scalar_lea.vmem %s10, %s569
        %p571 = pneg %p320
        %p572 = pneg %p317
        %p573 = scmp.lt.s32.totalorder %s31, 1
        %s574 = scalar_select %p573, %s31, 1
        %s575 = smul.addr %s574, 16
        %s576 = smul.addr %s575, 4
        %s577 = scalar_lea.vmem %s11, %s576
        %p578 = pneg %p346
        %p579 = pneg %p343
        %p580 = scmp.lt.s32.totalorder %s31, 1
        %s581 = scalar_select %p580, %s31, 1
        %s582 = scalar_lea.vmem %s12, %s581
        %p583 = pneg %p372
        %p584 = pneg %p369
        %p585 = pneg %p398
        %p586 = pneg %p395
        %s587 = sand.u32 %s385, 1
        %s588 = scalar_lea.sflag [#allocation4], %s587
        %s589 = sand.u32 %s385, 1
        %s590 = smul.addr %s589, 8
        %s591 = scalar_lea.vmem [#allocation3], %s590
        %p592 = scmp.lt.s32.totalorder %s32, 1
        %s593 = scalar_select %p592, %s32, 1
        %s594 = smul.addr %s593, 8
        %s595 = scalar_lea.vmem %s0, %s594
        %p596 = scmp.lt.s32.totalorder %s31, 1
        %s597 = scalar_select %p596, %s31, 1
        %s598 = scalar_lea.vmem %s1, %s597
        %p599 = scmp.lt.s32.totalorder %s31, 1
        %s600 = scalar_select %p599, %s31, 1
        %s601 = scalar_lea.vmem %s2, %s600
        %p602 = scmp.lt.s32.totalorder %s31, 1
        %s603 = scalar_select %p602, %s31, 1
        %s604 = smul.addr %s603, 4
        %s605 = smul.addr %s604, 4
        %s606 = scalar_lea.vmem %s3, %s605
        %p607 = scmp.lt.s32.totalorder %s31, 1
        %s608 = scalar_select %p607, %s31, 1
        %s609 = scalar_lea.vmem %s4, %s608
        %p610 = scmp.lt.s32.totalorder %s31, 1
        %s611 = scalar_select %p610, %s31, 1
        %s612 = smul.addr %s611, 4
        %s613 = smul.addr %s612, 4
        %s614 = scalar_lea.vmem %s5, %s613
        %p615 = scmp.lt.s32.totalorder %s31, 1
        %s616 = scalar_select %p615, %s31, 1
        %s617 = scalar_lea.vmem %s6, %s616
        %p618 = scmp.lt.s32.totalorder %s31, 1
        %s619 = scalar_select %p618, %s31, 1
        %s620 = scalar_lea.vmem %s7, %s619
        %p621 = scmp.lt.s32.totalorder %s31, 1
        %s622 = scalar_select %p621, %s31, 1
        %s623 = scalar_lea.vmem %s8, %s622
        %p624 = scmp.lt.s32.totalorder %s31, 1
        %s625 = scalar_select %p624, %s31, 1
        %s626 = smul.addr %s625, 4
        %s627 = smul.addr %s626, 4
        %s628 = scalar_lea.vmem %s9, %s627
        %p629 = scmp.lt.s32.totalorder %s31, 1
        %s630 = scalar_select %p629, %s31, 1
        %s631 = scalar_lea.vmem %s10, %s630
        %p632 = scmp.lt.s32.totalorder %s31, 1
        %s633 = scalar_select %p632, %s31, 1
        %s634 = smul.addr %s633, 16
        %s635 = smul.addr %s634, 4
        %s636 = scalar_lea.vmem %s11, %s635
        %p637 = scmp.lt.s32.totalorder %s31, 1
        %s638 = scalar_select %p637, %s31, 1
        %s639 = scalar_lea.vmem %s12, %s638
        %p641 = scmp.eq.s32.totalorder %s31, 0
        // Predicated region
        $region73: #{tpu_custom_call.1} parent=71 // pred_check
          %p642 = pneg %p641
        $region74: #{tpu_custom_call.1} parent=71 // pred_check_branch
          %644 = sbr.rel (%p642) target = $region76
        $region75: #{tpu_custom_call.1} parent=71 // pred_region
          %v645 = vld [vmem:[%s595] sm:$0xff]
          %s646 = smul.u32 %s32, 8
          %s647 = scalar_lea.vmem [#allocation2], %s646
          %vm648 = vcmask 261120
          %649 = vst.msk [vmem:[%s647] sm:$0xff] %vm648, %v645
        $region76: #{tpu_custom_call.1} parent=71 // pred_fallthru
          _
        %s650 = smul.u32 %s32, 8
        %s651 = scalar_lea.vmem [#allocation2], %s650
        %v652 = vld [vmem:[%s651] sm:$0xff]
        %vm653 = vcmask 261120
        %v654 = vsel %vm653, %v652, 0.0
        %655 = vadd.xlane.f32.xlu0 %v654
        %v656 = vpop.xlane.xlu0 %655
        %v657 = vrcp.pop 32.0
        %v658 = vmul.f32 %v656, %v657
        %v659 = vsub.f32 %v652, %v658
        %v660 = vmul.f32 %v659, %v659
        %v661 = vsel %vm653, %v660, 0.0
        %662 = vadd.xlane.f32.xlu0 %v661
        %v663 = vpop.xlane.xlu0 %662
        %v664 = vmul.f32 %v663, %v657
        %v665 = vadd.f32 %v664, 1e-05
        %v666 = vrsqrt.pop %v665
        %v667 = vmul.f32 %v659, %v666
        %v668 = vld [vmem:[%s598] sm:$0x1]
        %v670 = vlaneseq
        %v671 = vshrl.u32 %v670, 7
        %v672 = vsub.s32 0, %v671
        %v673 = vrot.slane %v668, %v672
        %v675 = vmul.f32 %v667, %v673
        %v676 = vld [vmem:[%s601] sm:$0x1]
        %v678 = vlaneseq
        %v679 = vshrl.u32 %v678, 7
        %v680 = vsub.s32 0, %v679
        %v681 = vrot.slane %v676, %v680
        %v683 = vadd.f32 %v675, %v681
        %v684 = vpack.c.bf16 %v683, %v683
        %v685 = vld [vmem:[%s606] sm:$0xf]
        %v686 = vld [vmem:[%s606 + $0x4] sm:$0xf]
        %v687 = vld [vmem:[%s606 + $0x8] sm:$0xf]
        %v688 = vld [vmem:[%s606 + $0xc] sm:$0xf]
        %v689 = vld [vmem:[%s609] sm:$0x1]
        %v691 = vlaneseq
        %v692 = vshrl.u32 %v691, 7
        %v693 = vsub.s32 0, %v692
        %v694 = vrot.slane %v689, %v693
        %v700 = vunpack.c.l.b16 %v685
        %v701 = vunpack.c.l.b16 %v686
        %v702 = vunpack.c.l.b16 %v687
        %v703 = vunpack.c.l.b16 %v688
        %v704 = vpack.c.b16 %v701, %v700
        %v705 = vpack.c.b16 %v703, %v702
        %v709 = vsel %vm653, %v684, 0
        %711 = vmatprep.subr.bf16.mxu0 0
        %712 = vmatpush1.bf16.msra.mxu0 %v704
        %713 = vmatprep.subr.bf16.mxu0 0
        %714 = vmatpush1.bf16.msra.mxu0 %v705
        %715 = vmatprep.subr.bf16.mxu0 0
        %716 = vmatpush1.bf16.msra.mxu0 0
        %717 = vmatprep.subr.bf16.mxu0 0
        %718 = vmatpush1.bf16.msra.mxu0 0
        %719 = vmatprep.subr.bf16.mxu0 0
        %720 = vmatpush1.bf16.msra.mxu0 0
        %721 = vmatprep.subr.bf16.mxu0 0
        %722 = vmatpush1.bf16.msra.mxu0 0
        %723 = vmatprep.subr.bf16.mxu0 0
        %724 = vmatpush1.bf16.msra.mxu0 0
        %725 = vmatprep.subr.bf16.mxu0 0
        %726 = vmatpush1.bf16.msra.mxu0 0
        %727 = vmatprep.subr.bf16.mxu0 0
        %728 = vmatpush1.bf16.msra.mxu0 0
        %729 = vmatprep.subr.bf16.mxu0 0
        %730 = vmatpush1.bf16.msra.mxu0 0
        %731 = vmatprep.subr.bf16.mxu0 0
        %732 = vmatpush1.bf16.msra.mxu0 0
        %733 = vmatprep.subr.bf16.mxu0 0
        %734 = vmatpush1.bf16.msra.mxu0 0
        %735 = vmatprep.subr.bf16.mxu0 0
        %736 = vmatpush1.bf16.msra.mxu0 0
        %737 = vmatprep.subr.bf16.mxu0 0
        %738 = vmatpush1.bf16.msra.mxu0 0
        %739 = vmatprep.subr.bf16.mxu0 0
        %740 = vmatpush1.bf16.msra.mxu0 0
        %741 = vmatprep.subr.bf16.mxu0 0
        %742 = vmatpush1.bf16.msra.mxu0 0
        %743 = vmatprep.mubr.bf16.mxu0 0
        %744 = vmatmul.mubr.bf16.gmra.mrb[0].mxu0 %v709
        %v745 = vpop.f32.mrb[0].mxu0
        %v746 = vadd.f32 %v694, %v745
        %v747 = vpop.f32.mrb[0].mxu0
        %v748 = vpop.f32.mrb[0].mxu0
        %v749 = vpop.f32.mrb[0].mxu0
        %750 = vdwg.mxu0
        %v751 = vmul.f32 %v746, 0.35355338
        %753 = vrot.lane.b32.xlu0 %v751, 120
        %v754 = vpop.permute.xlu0 %753
        %756 = vrot.lane.b32.xlu0 %v751, 112
        %v757 = vpop.permute.xlu0 %756
        %759 = vrot.lane.b32.xlu0 %v751, 104
        %v760 = vpop.permute.xlu0 %759
        %v762 = vpack.c.bf16 %v751, %v751
        %v763 = vpack.c.bf16 %v754, %v754
        %v764 = vpack.c.bf16 %v757, %v757
        %v765 = vpack.c.bf16 %v760, %v760
        %767 = vrot.lane.b32.xlu0 %v746, 120
        %v768 = vpop.permute.xlu0 %767
        %770 = vrot.lane.b32.xlu0 %v746, 112
        %v771 = vpop.permute.xlu0 %770
        %773 = vrot.lane.b32.xlu0 %v746, 104
        %v774 = vpop.permute.xlu0 %773
        %v776 = vpack.c.bf16 %v746, %v746
        %v777 = vpack.c.bf16 %v768, %v768
        %v778 = vpack.c.bf16 %v771, %v771
        %v779 = vpack.c.bf16 %v774, %v774
        %781 = vrot.lane.b32.xlu0 %v776, 96
        %v782 = vpop.permute.xlu0 %781
        %vm783 = vcmask 64512
        %v785 = vsel %vm783, %v762, 0
        %v788 = vsel %vm783, %v782, 0
        %790 = vmatprep.subr.bf16.mxu0 0
        %791 = vmatpush1.bf16.xpose.msra.mxu0 %v788
        %792 = vmatprep.subr.bf16.mxu0 0
        %793 = vmatpush1.bf16.xpose.msra.mxu0 0
        %794 = vmatprep.subr.bf16.mxu0 0
        %795 = vmatpush1.bf16.xpose.msra.mxu0 0
        %796 = vmatprep.subr.bf16.mxu0 0
        %797 = vmatpush1.bf16.xpose.msra.mxu0 0
        %798 = vmatprep.subr.bf16.mxu0 0
        %799 = vmatpush1.bf16.xpose.msra.mxu0 0
        %800 = vmatprep.subr.bf16.mxu0 0
        %801 = vmatpush1.bf16.xpose.msra.mxu0 0
        %802 = vmatprep.subr.bf16.mxu0 0
        %803 = vmatpush1.bf16.xpose.msra.mxu0 0
        %804 = vmatprep.subr.bf16.mxu0 0
        %805 = vmatpush1.bf16.xpose.msra.mxu0 0
        %806 = vmatprep.subr.bf16.mxu0 0
        %807 = vmatpush1.bf16.xpose.msra.mxu0 0
        %808 = vmatprep.subr.bf16.mxu0 0
        %809 = vmatpush1.bf16.xpose.msra.mxu0 0
        %810 = vmatprep.subr.bf16.mxu0 0
        %811 = vmatpush1.bf16.xpose.msra.mxu0 0
        %812 = vmatprep.subr.bf16.mxu0 0
        %813 = vmatpush1.bf16.xpose.msra.mxu0 0
        %814 = vmatprep.subr.bf16.mxu0 0
        %815 = vmatpush1.bf16.xpose.msra.mxu0 0
        %816 = vmatprep.subr.bf16.mxu0 0
        %817 = vmatpush1.bf16.xpose.msra.mxu0 0
        %818 = vmatprep.subr.bf16.mxu0 0
        %819 = vmatpush1.bf16.xpose.msra.mxu0 0
        %820 = vmatprep.subr.bf16.mxu0 0
        %821 = vmatpush1.bf16.xpose.msra.mxu0 0
        %822 = vmatprep.mubr.bf16.mxu0 0
        %823 = vmatmul.mubr.bf16.gmra.mrb[0].mxu0 %v785
        %v824 = vpop.f32.mrb[0].mxu0
        %v825 = vadd.f32 0.0, %v824
        %v826 = vpop.f32.mrb[0].mxu0
        %v827 = vpop.f32.mrb[0].mxu0
        %v828 = vpop.f32.mrb[0].mxu0
        %829 = vdwg.mxu0
        %831 = vrot.lane.b32.xlu0 %v777, 96
        %v832 = vpop.permute.xlu0 %831
        %v834 = vsel %vm783, %v763, 0
        %v837 = vsel %vm783, %v832, 0
        %839 = vmatprep.subr.bf16.mxu0 0
        %840 = vmatpush1.bf16.xpose.msra.mxu0 %v837
        %841 = vmatprep.subr.bf16.mxu0 0
        %842 = vmatpush1.bf16.xpose.msra.mxu0 0
        %843 = vmatprep.subr.bf16.mxu0 0
        %844 = vmatpush1.bf16.xpose.msra.mxu0 0
        %845 = vmatprep.subr.bf16.mxu0 0
        %846 = vmatpush1.bf16.xpose.msra.mxu0 0
        %847 = vmatprep.subr.bf16.mxu0 0
        %848 = vmatpush1.bf16.xpose.msra.mxu0 0
        %849 = vmatprep.subr.bf16.mxu0 0
        %850 = vmatpush1.bf16.xpose.msra.mxu0 0
        %851 = vmatprep.subr.bf16.mxu0 0
        %852 = vmatpush1.bf16.xpose.msra.mxu0 0
        %853 = vmatprep.subr.bf16.mxu0 0
        %854 = vmatpush1.bf16.xpose.msra.mxu0 0
        %855 = vmatprep.subr.bf16.mxu0 0
        %856 = vmatpush1.bf16.xpose.msra.mxu0 0
        %857 = vmatprep.subr.bf16.mxu0 0
        %858 = vmatpush1.bf16.xpose.msra.mxu0 0
        %859 = vmatprep.subr.bf16.mxu0 0
        %860 = vmatpush1.bf16.xpose.msra.mxu0 0
        %861 = vmatprep.subr.bf16.mxu0 0
        %862 = vmatpush1.bf16.xpose.msra.mxu0 0
        %863 = vmatprep.subr.bf16.mxu0 0
        %864 = vmatpush1.bf16.xpose.msra.mxu0 0
        %865 = vmatprep.subr.bf16.mxu0 0
        %866 = vmatpush1.bf16.xpose.msra.mxu0 0
        %867 = vmatprep.subr.bf16.mxu0 0
        %868 = vmatpush1.bf16.xpose.msra.mxu0 0
        %869 = vmatprep.subr.bf16.mxu0 0
        %870 = vmatpush1.bf16.xpose.msra.mxu0 0
        %871 = vmatprep.mubr.bf16.mxu0 0
        %872 = vmatmul.mubr.bf16.gmra.mrb[0].mxu0 %v834
        %v873 = vpop.f32.mrb[0].mxu0
        %v874 = vadd.f32 0.0, %v873
        %v875 = vpop.f32.mrb[0].mxu0
        %v876 = vpop.f32.mrb[0].mxu0
        %v877 = vpop.f32.mrb[0].mxu0
        %878 = vdwg.mxu0
        %880 = vrot.lane.b32.xlu0 %v778, 96
        %v881 = vpop.permute.xlu0 %880
        %v883 = vsel %vm783, %v764, 0
        %v886 = vsel %vm783, %v881, 0
        %888 = vmatprep.subr.bf16.mxu0 0
        %889 = vmatpush1.bf16.xpose.msra.mxu0 %v886
        %890 = vmatprep.subr.bf16.mxu0 0
        %891 = vmatpush1.bf16.xpose.msra.mxu0 0
        %892 = vmatprep.subr.bf16.mxu0 0
        %893 = vmatpush1.bf16.xpose.msra.mxu0 0
        %894 = vmatprep.subr.bf16.mxu0 0
        %895 = vmatpush1.bf16.xpose.msra.mxu0 0
        %896 = vmatprep.subr.bf16.mxu0 0
        %897 = vmatpush1.bf16.xpose.msra.mxu0 0
        %898 = vmatprep.subr.bf16.mxu0 0
        %899 = vmatpush1.bf16.xpose.msra.mxu0 0
        %900 = vmatprep.subr.bf16.mxu0 0
        %901 = vmatpush1.bf16.xpose.msra.mxu0 0
        %902 = vmatprep.subr.bf16.mxu0 0
        %903 = vmatpush1.bf16.xpose.msra.mxu0 0
        %904 = vmatprep.subr.bf16.mxu0 0
        %905 = vmatpush1.bf16.xpose.msra.mxu0 0
        %906 = vmatprep.subr.bf16.mxu0 0
        %907 = vmatpush1.bf16.xpose.msra.mxu0 0
        %908 = vmatprep.subr.bf16.mxu0 0
        %909 = vmatpush1.bf16.xpose.msra.mxu0 0
        %910 = vmatprep.subr.bf16.mxu0 0
        %911 = vmatpush1.bf16.xpose.msra.mxu0 0
        %912 = vmatprep.subr.bf16.mxu0 0
        %913 = vmatpush1.bf16.xpose.msra.mxu0 0
        %914 = vmatprep.subr.bf16.mxu0 0
        %915 = vmatpush1.bf16.xpose.msra.mxu0 0
        %916 = vmatprep.subr.bf16.mxu0 0
        %917 = vmatpush1.bf16.xpose.msra.mxu0 0
        %918 = vmatprep.subr.bf16.mxu0 0
        %919 = vmatpush1.bf16.xpose.msra.mxu0 0
        %920 = vmatprep.mubr.bf16.mxu0 0
        %921 = vmatmul.mubr.bf16.gmra.mrb[0].mxu0 %v883
        %v922 = vpop.f32.mrb[0].mxu0
        %v923 = vadd.f32 0.0, %v922
        %v924 = vpop.f32.mrb[0].mxu0
        %v925 = vpop.f32.mrb[0].mxu0
        %v926 = vpop.f32.mrb[0].mxu0
        %927 = vdwg.mxu0
        %929 = vrot.lane.b32.xlu0 %v779, 96
        %v930 = vpop.permute.xlu0 %929
        %v932 = vsel %vm783, %v765, 0
        %v935 = vsel %vm783, %v930, 0
        %937 = vmatprep.subr.bf16.mxu0 0
        %938 = vmatpush1.bf16.xpose.msra.mxu0 %v935
        %939 = vmatprep.subr.bf16.mxu0 0
        %940 = vmatpush1.bf16.xpose.msra.mxu0 0
        %941 = vmatprep.subr.bf16.mxu0 0
        %942 = vmatpush1.bf16.xpose.msra.mxu0 0
        %943 = vmatprep.subr.bf16.mxu0 0
        %944 = vmatpush1.bf16.xpose.msra.mxu0 0
        %945 = vmatprep.subr.bf16.mxu0 0
        %946 = vmatpush1.bf16.xpose.msra.mxu0 0
        %947 = vmatprep.subr.bf16.mxu0 0
        %948 = vmatpush1.bf16.xpose.msra.mxu0 0
        %949 = vmatprep.subr.bf16.mxu0 0
        %950 = vmatpush1.bf16.xpose.msra.mxu0 0
        %951 = vmatprep.subr.bf16.mxu0 0
        %952 = vmatpush1.bf16.xpose.msra.mxu0 0
        %953 = vmatprep.subr.bf16.mxu0 0
        %954 = vmatpush1.bf16.xpose.msra.mxu0 0
        %955 = vmatprep.subr.bf16.mxu0 0
        %956 = vmatpush1.bf16.xpose.msra.mxu0 0
        %957 = vmatprep.subr.bf16.mxu0 0
        %958 = vmatpush1.bf16.xpose.msra.mxu0 0
        %959 = vmatprep.subr.bf16.mxu0 0
        %960 = vmatpush1.bf16.xpose.msra.mxu0 0
        %961 = vmatprep.subr.bf16.mxu0 0
        %962 = vmatpush1.bf16.xpose.msra.mxu0 0
        %963 = vmatprep.subr.bf16.mxu0 0
        %964 = vmatpush1.bf16.xpose.msra.mxu0 0
        %965 = vmatprep.subr.bf16.mxu0 0
        %966 = vmatpush1.bf16.xpose.msra.mxu0 0
        %967 = vmatprep.subr.bf16.mxu0 0
        %968 = vmatpush1.bf16.xpose.msra.mxu0 0
        %969 = vmatprep.mubr.bf16.mxu0 0
        %970 = vmatmul.mubr.bf16.gmra.mrb[0].mxu0 %v932
        %v971 = vpop.f32.mrb[0].mxu0
        %v972 = vadd.f32 0.0, %v971
        %v973 = vpop.f32.mrb[0].mxu0
        %v974 = vpop.f32.mrb[0].mxu0
        %v975 = vpop.f32.mrb[0].mxu0
        %976 = vdwg.mxu0
        %v977 = vsel %vm783, %v825, -inf
        %978 = vmax.xlane.f32.xlu0 %v977
        %v979 = vpop.xlane.xlu0 %978
        %v980 = vsel %vm783, %v874, -inf
        %981 = vmax.xlane.f32.xlu0 %v980
        %v982 = vpop.xlane.xlu0 %981
        %v983 = vsel %vm783, %v923, -inf
        %984 = vmax.xlane.f32.xlu0 %v983
        %v985 = vpop.xlane.xlu0 %984
        %v986 = vsel %vm783, %v972, -inf
        %987 = vmax.xlane.f32.xlu0 %v986
        %v988 = vpop.xlane.xlu0 %987
        %v989 = vsub.f32 %v825, %v979
        %v990 = vsub.f32 %v874, %v982
        %v991 = vsub.f32 %v923, %v985
        %v992 = vsub.f32 %v972, %v988
        %v993 = vmul.f32 %v989, 1.442695
        %v994 = vpow.pop %v993
        %v995 = vmul.f32 %v990, 1.442695
        %v996 = vpow.pop %v995
        %v997 = vmul.f32 %v991, 1.442695
        %v998 = vpow.pop %v997
        %v999 = vmul.f32 %v992, 1.442695
        %v1000 = vpow.pop %v999
        %v1001 = vsel %vm783, %v994, 0.0
        %1002 = vadd.xlane.f32.xlu0 %v1001
        %v1003 = vpop.xlane.xlu0 %1002
        %v1004 = vsel %vm783, %v996, 0.0
        %1005 = vadd.xlane.f32.xlu0 %v1004
        %v1006 = vpop.xlane.xlu0 %1005
        %v1007 = vsel %vm783, %v998, 0.0
        %1008 = vadd.xlane.f32.xlu0 %v1007
        %v1009 = vpop.xlane.xlu0 %1008
        %v1010 = vsel %vm783, %v1000, 0.0
        %1011 = vadd.xlane.f32.xlu0 %v1010
        %v1012 = vpop.xlane.xlu0 %1011
        %v1013 = vrcp.pop %v1003
        %v1014 = vrcp.pop %v1006
        %v1015 = vrcp.pop %v1009
        %v1016 = vrcp.pop %v1012
        %v1017 = vmul.f32 %v994, %v1013
        %v1018 = vmul.f32 %v996, %v1014
        %v1019 = vmul.f32 %v998, %v1015
        %v1020 = vmul.f32 %v1000, %v1016
        %v1021 = vpack.c.bf16 %v1017, %v1017
        %v1022 = vpack.c.bf16 %v1018, %v1018
        %v1023 = vpack.c.bf16 %v1019, %v1019
        %v1024 = vpack.c.bf16 %v1020, %v1020
        %1025 = vrot.lane.b32.xlu0 %v776, 64
        %v1026 = vpop.permute.xlu0 %1025
        %v1028 = vsel %vm783, %v1021, 0
        %vm1030 = vcmask 1043456
        %v1032 = vsel %vm1030, %v1026, 0
        %1034 = vmatprep.subr.bf16.mxu0 0
        %1035 = vmatpush1.bf16.msra.mxu0 %v1032
        %1036 = vmatprep.subr.bf16.mxu0 0
        %1037 = vmatpush1.bf16.msra.mxu0 0
        %1038 = vmatprep.subr.bf16.mxu0 0
        %1039 = vmatpush1.bf16.msra.mxu0 0
        %1040 = vmatprep.subr.bf16.mxu0 0
        %1041 = vmatpush1.bf16.msra.mxu0 0
        %1042 = vmatprep.subr.bf16.mxu0 0
        %1043 = vmatpush1.bf16.msra.mxu0 0
        %1044 = vmatprep.subr.bf16.mxu0 0
        %1045 = vmatpush1.bf16.msra.mxu0 0
        %1046 = vmatprep.subr.bf16.mxu0 0
        %1047 = vmatpush1.bf16.msra.mxu0 0
        %1048 = vmatprep.subr.bf16.mxu0 0
        %1049 = vmatpush1.bf16.msra.mxu0 0
        %1050 = vmatprep.subr.bf16.mxu0 0
        %1051 = vmatpush1.bf16.msra.mxu0 0
        %1052 = vmatprep.subr.bf16.mxu0 0
        %1053 = vmatpush1.bf16.msra.mxu0 0
        %1054 = vmatprep.subr.bf16.mxu0 0
        %1055 = vmatpush1.bf16.msra.mxu0 0
        %1056 = vmatprep.subr.bf16.mxu0 0
        %1057 = vmatpush1.bf16.msra.mxu0 0
        %1058 = vmatprep.subr.bf16.mxu0 0
        %1059 = vmatpush1.bf16.msra.mxu0 0
        %1060 = vmatprep.subr.bf16.mxu0 0
        %1061 = vmatpush1.bf16.msra.mxu0 0
        %1062 = vmatprep.subr.bf16.mxu0 0
        %1063 = vmatpush1.bf16.msra.mxu0 0
        %1064 = vmatprep.subr.bf16.mxu0 0
        %1065 = vmatpush1.bf16.msra.mxu0 0
        %1066 = vmatprep.mubr.bf16.mxu0 0
        %1067 = vmatmul.mubr.bf16.gmra.mrb[0].mxu0 %v1028
        %v1068 = vpop.f32.mrb[0].mxu0
        %v1069 = vadd.f32 0.0, %v1068
        %v1070 = vpop.f32.mrb[0].mxu0
        %v1071 = vpop.f32.mrb[0].mxu0
        %v1072 = vpop.f32.mrb[0].mxu0
        %1073 = vdwg.mxu0
        %1074 = vrot.lane.b32.xlu0 %v777, 64
        %v1075 = vpop.permute.xlu0 %1074
        %v1077 = vsel %vm783, %v1022, 0
        %v1080 = vsel %vm1030, %v1075, 0
        %1082 = vmatprep.subr.bf16.mxu0 0
        %1083 = vmatpush1.bf16.msra.mxu0 %v1080
        %1084 = vmatprep.subr.bf16.mxu0 0
        %1085 = vmatpush1.bf16.msra.mxu0 0
        %1086 = vmatprep.subr.bf16.mxu0 0
        %1087 = vmatpush1.bf16.msra.mxu0 0
        %1088 = vmatprep.subr.bf16.mxu0 0
        %1089 = vmatpush1.bf16.msra.mxu0 0
        %1090 = vmatprep.subr.bf16.mxu0 0
        %1091 = vmatpush1.bf16.msra.mxu0 0
        %1092 = vmatprep.subr.bf16.mxu0 0
        %1093 = vmatpush1.bf16.msra.mxu0 0
        %1094 = vmatprep.subr.bf16.mxu0 0
        %1095 = vmatpush1.bf16.msra.mxu0 0
        %1096 = vmatprep.subr.bf16.mxu0 0
        %1097 = vmatpush1.bf16.msra.mxu0 0
        %1098 = vmatprep.subr.bf16.mxu0 0
        %1099 = vmatpush1.bf16.msra.mxu0 0
        %1100 = vmatprep.subr.bf16.mxu0 0
        %1101 = vmatpush1.bf16.msra.mxu0 0
        %1102 = vmatprep.subr.bf16.mxu0 0
        %1103 = vmatpush1.bf16.msra.mxu0 0
        %1104 = vmatprep.subr.bf16.mxu0 0
        %1105 = vmatpush1.bf16.msra.mxu0 0
        %1106 = vmatprep.subr.bf16.mxu0 0
        %1107 = vmatpush1.bf16.msra.mxu0 0
        %1108 = vmatprep.subr.bf16.mxu0 0
        %1109 = vmatpush1.bf16.msra.mxu0 0
        %1110 = vmatprep.subr.bf16.mxu0 0
        %1111 = vmatpush1.bf16.msra.mxu0 0
        %1112 = vmatprep.subr.bf16.mxu0 0
        %1113 = vmatpush1.bf16.msra.mxu0 0
        %1114 = vmatprep.mubr.bf16.mxu0 0
        %1115 = vmatmul.mubr.bf16.gmra.mrb[0].mxu0 %v1077
        %v1116 = vpop.f32.mrb[0].mxu0
        %v1117 = vadd.f32 0.0, %v1116
        %v1118 = vpop.f32.mrb[0].mxu0
        %v1119 = vpop.f32.mrb[0].mxu0
        %v1120 = vpop.f32.mrb[0].mxu0
        %1121 = vdwg.mxu0
        %1122 = vrot.lane.b32.xlu0 %v778, 64
        %v1123 = vpop.permute.xlu0 %1122
        %v1125 = vsel %vm783, %v1023, 0
        %v1128 = vsel %vm1030, %v1123, 0
        %1130 = vmatprep.subr.bf16.mxu0 0
        %1131 = vmatpush1.bf16.msra.mxu0 %v1128
        %1132 = vmatprep.subr.bf16.mxu0 0
        %1133 = vmatpush1.bf16.msra.mxu0 0
        %1134 = vmatprep.subr.bf16.mxu0 0
        %1135 = vmatpush1.bf16.msra.mxu0 0
        %1136 = vmatprep.subr.bf16.mxu0 0
        %1137 = vmatpush1.bf16.msra.mxu0 0
        %1138 = vmatprep.subr.bf16.mxu0 0
        %1139 = vmatpush1.bf16.msra.mxu0 0
        %1140 = vmatprep.subr.bf16.mxu0 0
        %1141 = vmatpush1.bf16.msra.mxu0 0
        %1142 = vmatprep.subr.bf16.mxu0 0
        %1143 = vmatpush1.bf16.msra.mxu0 0
        %1144 = vmatprep.subr.bf16.mxu0 0
        %1145 = vmatpush1.bf16.msra.mxu0 0
        %1146 = vmatprep.subr.bf16.mxu0 0
        %1147 = vmatpush1.bf16.msra.mxu0 0
        %1148 = vmatprep.subr.bf16.mxu0 0
        %1149 = vmatpush1.bf16.msra.mxu0 0
        %1150 = vmatprep.subr.bf16.mxu0 0
        %1151 = vmatpush1.bf16.msra.mxu0 0
        %1152 = vmatprep.subr.bf16.mxu0 0
        %1153 = vmatpush1.bf16.msra.mxu0 0
        %1154 = vmatprep.subr.bf16.mxu0 0
        %1155 = vmatpush1.bf16.msra.mxu0 0
        %1156 = vmatprep.subr.bf16.mxu0 0
        %1157 = vmatpush1.bf16.msra.mxu0 0
        %1158 = vmatprep.subr.bf16.mxu0 0
        %1159 = vmatpush1.bf16.msra.mxu0 0
        %1160 = vmatprep.subr.bf16.mxu0 0
        %1161 = vmatpush1.bf16.msra.mxu0 0
        %1162 = vmatprep.mubr.bf16.mxu0 0
        %1163 = vmatmul.mubr.bf16.gmra.mrb[0].mxu0 %v1125
        %v1164 = vpop.f32.mrb[0].mxu0
        %v1165 = vadd.f32 0.0, %v1164
        %v1166 = vpop.f32.mrb[0].mxu0
        %v1167 = vpop.f32.mrb[0].mxu0
        %v1168 = vpop.f32.mrb[0].mxu0
        %1169 = vdwg.mxu0
        %1170 = vrot.lane.b32.xlu0 %v779, 64
        %v1171 = vpop.permute.xlu0 %1170
        %v1173 = vsel %vm783, %v1024, 0
        %v1176 = vsel %vm1030, %v1171, 0
        %1178 = vmatprep.subr.bf16.mxu0 0
        %1179 = vmatpush1.bf16.msra.mxu0 %v1176
        %1180 = vmatprep.subr.bf16.mxu0 0
        %1181 = vmatpush1.bf16.msra.mxu0 0
        %1182 = vmatprep.subr.bf16.mxu0 0
        %1183 = vmatpush1.bf16.msra.mxu0 0
        %1184 = vmatprep.subr.bf16.mxu0 0
        %1185 = vmatpush1.bf16.msra.mxu0 0
        %1186 = vmatprep.subr.bf16.mxu0 0
        %1187 = vmatpush1.bf16.msra.mxu0 0
        %1188 = vmatprep.subr.bf16.mxu0 0
        %1189 = vmatpush1.bf16.msra.mxu0 0
        %1190 = vmatprep.subr.bf16.mxu0 0
        %1191 = vmatpush1.bf16.msra.mxu0 0
        %1192 = vmatprep.subr.bf16.mxu0 0
        %1193 = vmatpush1.bf16.msra.mxu0 0
        %1194 = vmatprep.subr.bf16.mxu0 0
        %1195 = vmatpush1.bf16.msra.mxu0 0
        %1196 = vmatprep.subr.bf16.mxu0 0
        %1197 = vmatpush1.bf16.msra.mxu0 0
        %1198 = vmatprep.subr.bf16.mxu0 0
        %1199 = vmatpush1.bf16.msra.mxu0 0
        %1200 = vmatprep.subr.bf16.mxu0 0
        %1201 = vmatpush1.bf16.msra.mxu0 0
        %1202 = vmatprep.subr.bf16.mxu0 0
        %1203 = vmatpush1.bf16.msra.mxu0 0
        %1204 = vmatprep.subr.bf16.mxu0 0
        %1205 = vmatpush1.bf16.msra.mxu0 0
        %1206 = vmatprep.subr.bf16.mxu0 0
        %1207 = vmatpush1.bf16.msra.mxu0 0
        %1208 = vmatprep.subr.bf16.mxu0 0
        %1209 = vmatpush1.bf16.msra.mxu0 0
        %1210 = vmatprep.mubr.bf16.mxu0 0
        %1211 = vmatmul.mubr.bf16.gmra.mrb[0].mxu0 %v1173
        %v1212 = vpop.f32.mrb[0].mxu0
        %v1213 = vadd.f32 0.0, %v1212
        %v1214 = vpop.f32.mrb[0].mxu0
        %v1215 = vpop.f32.mrb[0].mxu0
        %v1216 = vpop.f32.mrb[0].mxu0
        %1217 = vdwg.mxu0
        %1219 = vrot.lane.b32.xlu0 %v1117, 8
        %v1220 = vpop.permute.xlu0 %1219
        %1223 = vrot.lane.b32.xlu0 %v1165, 16
        %v1224 = vpop.permute.xlu0 %1223
        %1227 = vrot.lane.b32.xlu0 %v1213, 24
        %v1228 = vpop.permute.xlu0 %1227
        %v1230 = vsel %vm783, %v1069, %v1220
        %vm1231 = vcmask 130048
        %v1232 = vsel %vm1231, %v1230, %v1224
        %vm1233 = vcmask 195584
        %v1234 = vsel %vm1233, %v1232, %v1228
        %v1235 = vpack.c.bf16 %v1234, %v1234
        %v1236 = vld [vmem:[%s614] sm:$0xf]
        %v1237 = vld [vmem:[%s614 + $0x4] sm:$0xf]
        %v1238 = vld [vmem:[%s614 + $0x8] sm:$0xf]
        %v1239 = vld [vmem:[%s614 + $0xc] sm:$0xf]
        %v1240 = vld [vmem:[%s617] sm:$0x1]
        %v1242 = vlaneseq
        %v1243 = vshrl.u32 %v1242, 7
        %v1244 = vsub.s32 0, %v1243
        %v1245 = vrot.slane %v1240, %v1244
        %v1251 = vunpack.c.l.b16 %v1236
        %v1252 = vunpack.c.l.b16 %v1237
        %v1253 = vunpack.c.l.b16 %v1238
        %v1254 = vunpack.c.l.b16 %v1239
        %v1255 = vpack.c.b16 %v1252, %v1251
        %v1256 = vpack.c.b16 %v1254, %v1253
        %v1260 = vsel %vm653, %v1235, 0
        %1262 = vmatprep.subr.bf16.mxu0 0
        %1263 = vmatpush1.bf16.msra.mxu0 %v1255
        %1264 = vmatprep.subr.bf16.mxu0 0
        %1265 = vmatpush1.bf16.msra.mxu0 %v1256
        %1266 = vmatprep.subr.bf16.mxu0 0
        %1267 = vmatpush1.bf16.msra.mxu0 0
        %1268 = vmatprep.subr.bf16.mxu0 0
        %1269 = vmatpush1.bf16.msra.mxu0 0
        %1270 = vmatprep.subr.bf16.mxu0 0
        %1271 = vmatpush1.bf16.msra.mxu0 0
        %1272 = vmatprep.subr.bf16.mxu0 0
        %1273 = vmatpush1.bf16.msra.mxu0 0
        %1274 = vmatprep.subr.bf16.mxu0 0
        %1275 = vmatpush1.bf16.msra.mxu0 0
        %1276 = vmatprep.subr.bf16.mxu0 0
        %1277 = vmatpush1.bf16.msra.mxu0 0
        %1278 = vmatprep.subr.bf16.mxu0 0
        %1279 = vmatpush1.bf16.msra.mxu0 0
        %1280 = vmatprep.subr.bf16.mxu0 0
        %1281 = vmatpush1.bf16.msra.mxu0 0
        %1282 = vmatprep.subr.bf16.mxu0 0
        %1283 = vmatpush1.bf16.msra.mxu0 0
        %1284 = vmatprep.subr.bf16.mxu0 0
        %1285 = vmatpush1.bf16.msra.mxu0 0
        %1286 = vmatprep.subr.bf16.mxu0 0
        %1287 = vmatpush1.bf16.msra.mxu0 0
        %1288 = vmatprep.subr.bf16.mxu0 0
        %1289 = vmatpush1.bf16.msra.mxu0 0
        %1290 = vmatprep.subr.bf16.mxu0 0
        %1291 = vmatpush1.bf16.msra.mxu0 0
        %1292 = vmatprep.subr.bf16.mxu0 0
        %1293 = vmatpush1.bf16.msra.mxu0 0
        %1294 = vmatprep.mubr.bf16.mxu0 0
        %1295 = vmatmul.mubr.bf16.gmra.mrb[0].mxu0 %v1260
        %v1296 = vpop.f32.mrb[0].mxu0
        %v1297 = vadd.f32 %v1245, %v1296
        %v1298 = vpop.f32.mrb[0].mxu0
        %v1299 = vpop.f32.mrb[0].mxu0
        %v1300 = vpop.f32.mrb[0].mxu0
        %1301 = vdwg.mxu0
        %v1302 = vadd.f32 %v652, %v1297
        %v1303 = vsel %vm653, %v1302, 0.0
        %1304 = vadd.xlane.f32.xlu0 %v1303
        %v1305 = vpop.xlane.xlu0 %1304
        %v1306 = vmul.f32 %v1305, %v657
        %v1307 = vsub.f32 %v1302, %v1306
        %v1308 = vmul.f32 %v1307, %v1307
        %v1309 = vsel %vm653, %v1308, 0.0
        %1310 = vadd.xlane.f32.xlu0 %v1309
        %v1311 = vpop.xlane.xlu0 %1310
        %v1312 = vmul.f32 %v1311, %v657
        %v1313 = vadd.f32 %v1312, 1e-05
        %v1314 = vrsqrt.pop %v1313
        %v1315 = vmul.f32 %v1307, %v1314
        %v1316 = vld [vmem:[%s620] sm:$0x1]
        %v1318 = vlaneseq
        %v1319 = vshrl.u32 %v1318, 7
        %v1320 = vsub.s32 0, %v1319
        %v1321 = vrot.slane %v1316, %v1320
        %v1323 = vmul.f32 %v1315, %v1321
        %v1324 = vld [vmem:[%s623] sm:$0x1]
        %v1326 = vlaneseq
        %v1327 = vshrl.u32 %v1326, 7
        %v1328 = vsub.s32 0, %v1327
        %v1329 = vrot.slane %v1324, %v1328
        %v1331 = vadd.f32 %v1323, %v1329
        %v1332 = vpack.c.bf16 %v1331, %v1331
        %v1333 = vld [vmem:[%s628] sm:$0xf]
        %v1334 = vld [vmem:[%s628 + $0x4] sm:$0xf]
        %v1335 = vld [vmem:[%s628 + $0x8] sm:$0xf]
        %v1336 = vld [vmem:[%s628 + $0xc] sm:$0xf]
        %v1337 = vld [vmem:[%s631] sm:$0x1]
        %v1339 = vlaneseq
        %v1340 = vshrl.u32 %v1339, 7
        %v1341 = vsub.s32 0, %v1340
        %v1342 = vrot.slane %v1337, %v1341
        %v1348 = vunpack.c.l.b16 %v1333
        %v1349 = vunpack.c.l.b16 %v1334
        %v1350 = vunpack.c.l.b16 %v1335
        %v1351 = vunpack.c.l.b16 %v1336
        %v1352 = vpack.c.b16 %v1349, %v1348
        %v1353 = vpack.c.b16 %v1351, %v1350
        %v1357 = vsel %vm653, %v1332, 0
        %1359 = vmatprep.subr.bf16.mxu0 0
        %1360 = vmatpush1.bf16.msra.mxu0 %v1352
        %1361 = vmatprep.subr.bf16.mxu0 0
        %1362 = vmatpush1.bf16.msra.mxu0 %v1353
        %1363 = vmatprep.subr.bf16.mxu0 0
        %1364 = vmatpush1.bf16.msra.mxu0 0
        %1365 = vmatprep.subr.bf16.mxu0 0
        %1366 = vmatpush1.bf16.msra.mxu0 0
        %1367 = vmatprep.subr.bf16.mxu0 0
        %1368 = vmatpush1.bf16.msra.mxu0 0
        %1369 = vmatprep.subr.bf16.mxu0 0
        %1370 = vmatpush1.bf16.msra.mxu0 0
        %1371 = vmatprep.subr.bf16.mxu0 0
        %1372 = vmatpush1.bf16.msra.mxu0 0
        %1373 = vmatprep.subr.bf16.mxu0 0
        %1374 = vmatpush1.bf16.msra.mxu0 0
        %1375 = vmatprep.subr.bf16.mxu0 0
        %1376 = vmatpush1.bf16.msra.mxu0 0
        %1377 = vmatprep.subr.bf16.mxu0 0
        %1378 = vmatpush1.bf16.msra.mxu0 0
        %1379 = vmatprep.subr.bf16.mxu0 0
        %1380 = vmatpush1.bf16.msra.mxu0 0
        %1381 = vmatprep.subr.bf16.mxu0 0
        %1382 = vmatpush1.bf16.msra.mxu0 0
        %1383 = vmatprep.subr.bf16.mxu0 0
        %1384 = vmatpush1.bf16.msra.mxu0 0
        %1385 = vmatprep.subr.bf16.mxu0 0
        %1386 = vmatpush1.bf16.msra.mxu0 0
        %1387 = vmatprep.subr.bf16.mxu0 0
        %1388 = vmatpush1.bf16.msra.mxu0 0
        %1389 = vmatprep.subr.bf16.mxu0 0
        %1390 = vmatpush1.bf16.msra.mxu0 0
        %1391 = vmatprep.mubr.bf16.mxu0 0
        %1392 = vmatmul.mubr.bf16.gmra.mrb[0].mxu0 %v1357
        %v1393 = vpop.f32.mrb[0].mxu0
        %v1394 = vadd.f32 %v1342, %v1393
        %v1395 = vpop.f32.mrb[0].mxu0
        %v1396 = vpop.f32.mrb[0].mxu0
        %v1397 = vpop.f32.mrb[0].mxu0
        %1398 = vdwg.mxu0
        %v1399 = vmul.f32 %v1394, 1.702
        %v1400 = vxor.u32 %v1399, 2147483648
        %v1401 = vmul.f32 %v1400, 1.442695
        %v1402 = vpow.pop %v1401
        %v1403 = vadd.f32 %v1402, 1.0
        %v1404 = vrcp.pop %v1403
        %v1405 = vmul.f32 1.0, %v1404
        %v1406 = vmul.f32 %v1394, %v1405
        %v1407 = vpack.c.bf16 %v1406, %v1406
        %v1408 = vld [vmem:[%s636] sm:$0xf]
        %v1409 = vld [vmem:[%s636 + $0x4] sm:$0xf]
        %v1410 = vld [vmem:[%s636 + $0x8] sm:$0xf]
        %v1411 = vld [vmem:[%s636 + $0xc] sm:$0xf]
        %v1412 = vld [vmem:[%s636 + $0x10] sm:$0xf]
        %v1413 = vld [vmem:[%s636 + $0x14] sm:$0xf]
        %v1414 = vld [vmem:[%s636 + $0x18] sm:$0xf]
        %v1415 = vld [vmem:[%s636 + $0x1c] sm:$0xf]
        %v1416 = vld [vmem:[%s636 + $0x20] sm:$0xf]
        %v1417 = vld [vmem:[%s636 + $0x24] sm:$0xf]
        %v1418 = vld [vmem:[%s636 + $0x28] sm:$0xf]
        %v1419 = vld [vmem:[%s636 + $0x2c] sm:$0xf]
        %v1420 = vld [vmem:[%s636 + $0x30] sm:$0xf]
        %v1421 = vld [vmem:[%s636 + $0x34] sm:$0xf]
        %v1422 = vld [vmem:[%s636 + $0x38] sm:$0xf]
        %v1423 = vld [vmem:[%s636 + $0x3c] sm:$0xf]
        %v1424 = vld [vmem:[%s639] sm:$0x1]
        %v1426 = vlaneseq
        %v1427 = vshrl.u32 %v1426, 7
        %v1428 = vsub.s32 0, %v1427
        %v1429 = vrot.slane %v1424, %v1428
        %v1447 = vunpack.c.l.b16 %v1408
        %v1448 = vunpack.c.l.b16 %v1409
        %v1449 = vunpack.c.l.b16 %v1410
        %v1450 = vunpack.c.l.b16 %v1411
        %v1451 = vunpack.c.l.b16 %v1412
        %v1452 = vunpack.c.l.b16 %v1413
        %v1453 = vunpack.c.l.b16 %v1414
        %v1454 = vunpack.c.l.b16 %v1415
        %v1455 = vunpack.c.l.b16 %v1416
        %v1456 = vunpack.c.l.b16 %v1417
        %v1457 = vunpack.c.l.b16 %v1418
        %v1458 = vunpack.c.l.b16 %v1419
        %v1459 = vunpack.c.l.b16 %v1420
        %v1460 = vunpack.c.l.b16 %v1421
        %v1461 = vunpack.c.l.b16 %v1422
        %v1462 = vunpack.c.l.b16 %v1423
        %v1463 = vpack.c.b16 %v1448, %v1447
        %v1464 = vpack.c.b16 %v1450, %v1449
        %v1465 = vpack.c.b16 %v1452, %v1451
        %v1466 = vpack.c.b16 %v1454, %v1453
        %v1467 = vpack.c.b16 %v1456, %v1455
        %v1468 = vpack.c.b16 %v1458, %v1457
        %v1469 = vpack.c.b16 %v1460, %v1459
        %v1470 = vpack.c.b16 %v1462, %v1461
        %1479 = vmatprep.subr.bf16.mxu0 0
        %1480 = vmatpush1.bf16.msra.mxu0 %v1463
        %1481 = vmatprep.subr.bf16.mxu0 0
        %1482 = vmatpush1.bf16.msra.mxu0 %v1464
        %1483 = vmatprep.subr.bf16.mxu0 0
        %1484 = vmatpush1.bf16.msra.mxu0 %v1465
        %1485 = vmatprep.subr.bf16.mxu0 0
        %1486 = vmatpush1.bf16.msra.mxu0 %v1466
        %1487 = vmatprep.subr.bf16.mxu0 0
        %1488 = vmatpush1.bf16.msra.mxu0 %v1467
        %1489 = vmatprep.subr.bf16.mxu0 0
        %1490 = vmatpush1.bf16.msra.mxu0 %v1468
        %1491 = vmatprep.subr.bf16.mxu0 0
        %1492 = vmatpush1.bf16.msra.mxu0 %v1469
        %1493 = vmatprep.subr.bf16.mxu0 0
        %1494 = vmatpush1.bf16.msra.mxu0 %v1470
        %1495 = vmatprep.subr.bf16.mxu0 0
        %1496 = vmatpush1.bf16.msra.mxu0 0
        %1497 = vmatprep.subr.bf16.mxu0 0
        %1498 = vmatpush1.bf16.msra.mxu0 0
        %1499 = vmatprep.subr.bf16.mxu0 0
        %1500 = vmatpush1.bf16.msra.mxu0 0
        %1501 = vmatprep.subr.bf16.mxu0 0
        %1502 = vmatpush1.bf16.msra.mxu0 0
        %1503 = vmatprep.subr.bf16.mxu0 0
        %1504 = vmatpush1.bf16.msra.mxu0 0
        %1505 = vmatprep.subr.bf16.mxu0 0
        %1506 = vmatpush1.bf16.msra.mxu0 0
        %1507 = vmatprep.subr.bf16.mxu0 0
        %1508 = vmatpush1.bf16.msra.mxu0 0
        %1509 = vmatprep.subr.bf16.mxu0 0
        %1510 = vmatpush1.bf16.msra.mxu0 0
        %1511 = vmatprep.mubr.bf16.mxu0 0
        %1512 = vmatmul.mubr.bf16.gmra.mrb[0].mxu0 %v1407
        %v1513 = vpop.f32.mrb[0].mxu0
        %v1514 = vadd.f32 %v1429, %v1513
        %v1515 = vpop.f32.mrb[0].mxu0
        %v1516 = vpop.f32.mrb[0].mxu0
        %v1517 = vpop.f32.mrb[0].mxu0
        %1518 = vdwg.mxu0
        %v1519 = vadd.f32 %v1302, %v1514
        %1520 = vst.msk [vmem:[%s651] sm:$0xff] %vm653, %v1519
        %1521 = vst.msk [vmem:[%s591] sm:$0xff] %vm653, %v1519
        %s1522 = sand.u32 %s385, 1
        %s1523 = scalar_lea.sflag [#allocation4], %s1522
        %s1524 = sand.u32 %s385, 1
        %s1525 = smul.addr %s1524, 8
        %s1526 = scalar_lea.vmem [#allocation3], %s1525
        // Predicated region
        $region77: #{tpu_custom_call.1} parent=71 // pred_check
          %p1527 = pneg %p395
        $region78: #{tpu_custom_call.1} parent=71 // pred_check_branch
          %1529 = sbr.rel (%p1527) target = $region80
        $region79: #{tpu_custom_call.1} parent=71 // pred_region
          %s1531 = ssub.s32 128, 128
          %1532 = vsyncadd %s1523, %s1531
          %s1533 = smul.addr %s32, 128
          %s1534 = scalar_lea.hbm %s13, %s1533
          %s1536 = sshll.u32 %s1526, 4
          %s1537 = int_to_ptr.vmem [resolvable:$true] %s1536
          %1539 = dma.vmem_to_hbm [thread:$0]  %s1537, 128, %s1534, %s1523
        $region80: #{tpu_custom_call.1} parent=71 // pred_fallthru
          _
      $region72: #{tpu_custom_call.1} parent=5 // pred_fallthru
        _
      %p1540 = scmp.le.s32.totalorder 2, %s22
      // Predicated region
      $region81: #{tpu_custom_call.1} parent=5 // pred_check
        %p1541 = pneg %p1540
      $region82: #{tpu_custom_call.1} parent=5 // pred_check_branch
        %1543 = sbr.rel (%p1541) target = $region84
      $region83: #{tpu_custom_call.1} parent=5 // pred_region
        %s1544 = ssub.s32 %s22, 2
        // Predicated region
        $region85: #{tpu_custom_call.1} parent=83 // pred_check
          %p1545 = pneg %p401
        $region86: #{tpu_custom_call.1} parent=83 // pred_check_branch
          %1547 = sbr.rel (%p1545) target = $region88
        $region87: #{tpu_custom_call.1} parent=83 // pred_region
          %s1548 = sand.u32 %s386, 1
          %s1549 = scalar_lea.sflag [#allocation4], %s1548
          %s1550 = sand.u32 %s386, 1
          %s1551 = smul.addr %s1550, 8
          %s1552 = scalar_lea.vmem [#allocation3], %s1551
          %1553 = dma.done %s1549, 128
        $region88: #{tpu_custom_call.1} parent=83 // pred_fallthru
          _
      $region84: #{tpu_custom_call.1} parent=5 // pred_fallthru
        _
    $region6: #{tpu_custom_call.1} parent=1 // loop_footer
      %s26 = sadd.s32 1, %s22
    $region7: #{tpu_custom_call.1} parent=1 // loop_footer_branch
      %21 = sbr.rel target = $region3
    $region8: #{tpu_custom_call.1} parent=1 // loop_exit
      _
    %1554 = vsyncpa [#allocation4], 1
    %s1555 = scalar_lea.sflag [#allocation4], 1
    %1556 = vsyncpa %s1555, 1

</llo_original>
